<compile_context>
chip_gen: v5e
topology: v5e:2x2
jax: 0.10.0
libtpu: 0.0.40
codegen_flags: <defaults>
</compile_context>

<pallas_src>
import functools

import jax
import jax.numpy as jnp
from jax.experimental import pallas as pl
from jax.experimental.pallas import tpu as pltpu

FIRST_DIM = 512
SECOND_DIM = 256
OUTPUT_DIM = 128


def _round_up(x, m):
    return (x + m - 1) // m * m


@functools.lru_cache(maxsize=1)
def _hidden_tanh_bf16_default():
    """bf16 EUP exists on v6e / v7x; v5e and older have no bf16 VPU/EUP."""
    try:
        kind = jax.devices()[0].device_kind.lower()
    except Exception:
        return False
    return ("v6" in kind) or ("v7" in kind) or ("7x" in kind)


# ---------------------------------------------------------------------------
# Kernel
# ---------------------------------------------------------------------------

def _fused_both_nets_kernel(x_ref, w1_ref, b1_ref, w2_ref, b2_ref,
                            w3_ref, b3_ref, o_ref, *, hidden_tanh_bf16):
    """One batch tile, BOTH nets fused.

    x_ref : (bm, Fp)          bf16
    w1_ref: (Fp, 1024)        bf16   [pi cols 0..511 | vf cols 512..1023]
    b1_ref: (1, 1024)         f32
    w2_ref: (2, 512, 256)     bf16   [0] = pi, [1] = vf
    b2_ref: (2, 1, 256)       f32
    w3_ref: (2, 256, 128)     bf16
    b3_ref: (2, 1, 128)       f32
    o_ref : (bm, 256)         f32    [pi lanes 0..127 | vf lanes 128..255]
    """
    bf16 = jnp.bfloat16

    def hidden_act(h_f32):
        # Hidden tanh: bf16 EUP on v6e/v7x (next matmul consumes bf16 anyway),
        # f32 EUP on v5e.
        if hidden_tanh_bf16:
            return jnp.tanh(h_f32.astype(bf16))
        return jnp.tanh(h_f32).astype(bf16)

    # Layer 1: one wide (bm, Fp) @ (Fp, 1024) matmul shared by both nets.
    h1 = jnp.dot(x_ref[...], w1_ref[...], preferred_element_type=jnp.float32)
    h1 = hidden_act(h1 + b1_ref[...])                       # (bm, 1024) bf16

    def tail(h1_half, net):
        h2 = jnp.dot(h1_half, w2_ref[net], preferred_element_type=jnp.float32)
        h2 = hidden_act(h2 + b2_ref[net])                    # (bm, 256) bf16
        h3 = jnp.dot(h2, w3_ref[net], preferred_element_type=jnp.float32)
        return jnp.tanh(h3 + b3_ref[net])                    # final tanh in f32

    # Lane-aligned splits / stores (512 and 128 are multiples of 128).
    o_ref[:, :OUTPUT_DIM] = tail(h1[:, :FIRST_DIM], 0).astype(o_ref.dtype)
    o_ref[:, OUTPUT_DIM:] = tail(h1[:, FIRST_DIM:], 1).astype(o_ref.dtype)


def _fused_forward(x_bf16, prepared, *, bm, hidden_tanh_bf16):
    """Run both nets on a padded (Bp, Fp) bf16 input; returns (Bp, 256) f32."""
    w1cat, b1cat, w2s, b2s, w3s, b3s = prepared
    Bp, Fp = x_bf16.shape
    n_batch = Bp // bm

    kernel = functools.partial(_fused_both_nets_kernel,
                               hidden_tanh_bf16=hidden_tanh_bf16)

    flops = 2 * Bp * (Fp * 2 * FIRST_DIM
                      + 2 * (FIRST_DIM * SECOND_DIM + SECOND_DIM * OUTPUT_DIM))
    transcendentals = 2 * Bp * (FIRST_DIM + SECOND_DIM + OUTPUT_DIM)
    bytes_accessed = (
        x_bf16.size * 2
        + (w1cat.size + w2s.size + w3s.size) * 2
        + (b1cat.size + b2s.size + b3s.size) * 4
        + Bp * 2 * OUTPUT_DIM * 4
    )

    return pl.pallas_call(
        kernel,
        out_shape=jax.ShapeDtypeStruct((Bp, 2 * OUTPUT_DIM), jnp.float32),
        grid_spec=pltpu.PrefetchScalarGridSpec(
            num_scalar_prefetch=0,
            grid=(n_batch,),
            in_specs=[
                pl.BlockSpec((bm, Fp), lambda b: (b, 0)),                     # x
                pl.BlockSpec((Fp, 2 * FIRST_DIM), lambda b: (0, 0)),          # w1cat
                pl.BlockSpec((1, 2 * FIRST_DIM), lambda b: (0, 0)),           # b1cat
                pl.BlockSpec((2, FIRST_DIM, SECOND_DIM), lambda b: (0, 0, 0)),  # w2s
                pl.BlockSpec((2, 1, SECOND_DIM), lambda b: (0, 0, 0)),        # b2s
                pl.BlockSpec((2, SECOND_DIM, OUTPUT_DIM), lambda b: (0, 0, 0)),  # w3s
                pl.BlockSpec((2, 1, OUTPUT_DIM), lambda b: (0, 0, 0)),        # b3s
            ],
            out_specs=pl.BlockSpec((bm, 2 * OUTPUT_DIM), lambda b: (b, 0)),
        ),
        compiler_params=pltpu.CompilerParams(
            # Every batch tile writes a distinct output block; weight block
            # indices never change so they are DMA'd exactly once.
            # TODO(synk): on v7x, pltpu.CORE_PARALLEL here would split batch
            # tiles across the 2 TensorCores when n_batch > 1.
            dimension_semantics=("parallel",),
        ),
        cost_estimate=pl.CostEstimate(
            flops=flops,
            transcendentals=transcendentals,
            bytes_accessed=bytes_accessed,
        ),
    )(x_bf16, w1cat, b1cat, w2s, b2s, w3s, b3s)


# ---------------------------------------------------------------------------
# One-time weight preparation (hoisted out of the per-call path)
# ---------------------------------------------------------------------------

def prepare_flow_mlp_extractor_params(params):
    """Pad W1 rows to a multiple of 128, concat layer-1 across nets, stack
    layers 2/3 on a leading net axis, cast weights to bf16 / biases to f32.
    Call ONCE and reuse the result across forward calls."""
    w1_pi, b1_pi, w2_pi, b2_pi, w3_pi, b3_pi = params["pi"]
    w1_vf, b1_vf, w2_vf, b2_vf, w3_vf, b3_vf = params["vf"]

    f_in = w1_pi.shape[0]
    f_padded = _round_up(f_in, 128)

    def pad_w1(w):
        return jnp.pad(w, ((0, f_padded - f_in), (0, 0)))

    w1cat = jnp.concatenate([pad_w1(w1_pi), pad_w1(w1_vf)], axis=1).astype(jnp.bfloat16)
    b1cat = jnp.concatenate([b1_pi, b1_vf], axis=1).astype(jnp.float32)
    w2s = jnp.stack([w2_pi, w2_vf]).astype(jnp.bfloat16)
    b2s = jnp.stack([b2_pi, b2_vf]).astype(jnp.float32)
    w3s = jnp.stack([w3_pi, w3_vf]).astype(jnp.bfloat16)
    b3s = jnp.stack([b3_pi, b3_vf]).astype(jnp.float32)
    return (w1cat, b1cat, w2s, b2s, w3s, b3s)


# ---------------------------------------------------------------------------
# Forward wrapper
# ---------------------------------------------------------------------------

def _pick_batch_tiling(B, bm_cap):
    """Return (b_padded, bm_eff).

    Small batches (B <= 128) pad only to a multiple of 16 (bf16 sublane pack).
    Larger batches pad to a multiple of 128 and use a tile (multiple of 128)
    that divides the padded batch exactly, so there is no over-padding."""
    if B <= 128:
        bp = max(16, _round_up(B, 16))
        return bp, bp
    bp = _round_up(B, 128)
    q = bp // 128
    cap_blocks = max(1, min(bm_cap, bp) // 128)
    for d in range(cap_blocks, 0, -1):
        if q % d == 0:
            return bp, d * 128
    return bp, 128


@functools.partial(jax.jit, static_argnames=("bm", "hidden_tanh_bf16"))
def _forward_impl(features, prepared, *, bm, hidden_tanh_bf16):
    B, F = features.shape
    f_padded = prepared[0].shape[0]
    b_padded, bm_eff = _pick_batch_tiling(B, bm)
    x = jnp.pad(features, ((0, b_padded - B), (0, f_padded - F))).astype(jnp.bfloat16)
    fused = _fused_forward(x, prepared, bm=bm_eff,
                           hidden_tanh_bf16=hidden_tanh_bf16)      # (Bp, 256)
    return fused[:B, :OUTPUT_DIM], fused[:B, OUTPUT_DIM:]


def flow_mlp_extractor_forward(features, prepared_params, *, bm=512,
                               hidden_tanh_bf16=None):
    """Equivalent of FlowMlpExtractor.forward -> (latent_pi, latent_vf).

    `prepared_params` must come from `prepare_flow_mlp_extractor_params`."""
    if hidden_tanh_bf16 is None:
        hidden_tanh_bf16 = _hidden_tanh_bf16_default()
    bm = max(128, int(bm))  # tile cap; actual tile is rounded/validated inside
    return _forward_impl(features, prepared_params, bm=bm,
                         hidden_tanh_bf16=bool(hidden_tanh_bf16))


# ---------------------------------------------------------------------------
# Parameter init + references (for the self-test)
# ---------------------------------------------------------------------------

def _init_linear(key, in_dim, out_dim):
    """PyTorch nn.Linear default init: U(-1/sqrt(in), 1/sqrt(in)) for W and b."""
    kw, kb = jax.random.split(key)
    bound = 1.0 / jnp.sqrt(jnp.float32(in_dim))
    w = jax.random.uniform(kw, (out_dim, in_dim), jnp.float32, -bound, bound)
    b = jax.random.uniform(kb, (out_dim,), jnp.float32, -bound, bound)
    # Kernel consumes W as (in, out) and b as (1, out).
    return w.T, b.reshape(1, out_dim)


def init_flow_mlp_extractor_params(key, feature_dim):
    keys = jax.random.split(key, 6)
    pi = (*_init_linear(keys[0], feature_dim, FIRST_DIM),
          *_init_linear(keys[1], FIRST_DIM, SECOND_DIM),
          *_init_linear(keys[2], SECOND_DIM, OUTPUT_DIM))
    vf = (*_init_linear(keys[3], feature_dim, FIRST_DIM),
          *_init_linear(keys[4], FIRST_DIM, SECOND_DIM),
          *_init_linear(keys[5], SECOND_DIM, OUTPUT_DIM))
    return {"pi": pi, "vf": vf}


def _reference_mlp3_kernel_numerics(x, net, hidden_tanh_bf16):
    """Mirrors the kernel: bf16 MXU operands, f32 accumulation, f32 bias-add,
    hidden tanh in bf16 (v6e/v7x) or f32 (v5e), final tanh in f32."""
    w1, b1, w2, b2, w3, b3 = net
    bf = jnp.bfloat16

    def hidden_act(h):
        if hidden_tanh_bf16:
            return jnp.tanh(h.astype(bf))
        return jnp.tanh(h).astype(bf)

    h = jnp.dot(x.astype(bf), w1.astype(bf), preferred_element_type=jnp.float32) + b1
    h = hidden_act(h)
    h = jnp.dot(h, w2.astype(bf), preferred_element_type=jnp.float32) + b2
    h = hidden_act(h)
    h = jnp.dot(h, w3.astype(bf), preferred_element_type=jnp.float32) + b3
    return jnp.tanh(h)


def _reference_mlp3_f32(x, net):
    w1, b1, w2, b2, w3, b3 = net
    h = jnp.tanh(x @ w1 + b1)
    h = jnp.tanh(h @ w2 + b2)
    return jnp.tanh(h @ w3 + b3)


if __name__ == "__main__":
    key = jax.random.PRNGKey(0)
    k_params, k_x = jax.random.split(key)

    batch = 8
    feature_dim = 64  # e.g. output of a CNN features extractor

    params = init_flow_mlp_extractor_params(k_params, feature_dim)
    prepared = prepare_flow_mlp_extractor_params(params)       # one-time prep
    prepared = jax.block_until_ready(prepared)

    features = jax.random.normal(k_x, (batch, feature_dim), jnp.float32)

    hidden_bf16 = _hidden_tanh_bf16_default()
    latent_pi, latent_vf = flow_mlp_extractor_forward(
        features, prepared, hidden_tanh_bf16=hidden_bf16)
    jax.block_until_ready((latent_pi, latent_vf))

    assert latent_pi.shape == (batch, OUTPUT_DIM)
    assert latent_vf.shape == (batch, OUTPUT_DIM)

    # Tight check against a reference that mirrors the kernel's numerics.
    ref_pi = _reference_mlp3_kernel_numerics(features, params["pi"], hidden_bf16)
    ref_vf = _reference_mlp3_kernel_numerics(features, params["vf"], hidden_bf16)
    assert jnp.allclose(latent_pi, ref_pi, atol=1e-2, rtol=1e-2)
    assert jnp.allclose(latent_vf, ref_vf, atol=1e-2, rtol=1e-2)

    # Loose check against the pure-f32 PyTorch-equivalent math (bf16 cast error only).
    ref_pi32 = _reference_mlp3_f32(features, params["pi"])
    ref_vf32 = _reference_mlp3_f32(features, params["vf"])
    assert jnp.allclose(latent_pi, ref_pi32, atol=6e-2, rtol=6e-2)
    assert jnp.allclose(latent_vf, ref_vf32, atol=6e-2, rtol=6e-2)

    print("KERNEL_OK")
</pallas_src>

<mosaic_0001>
module attributes {stable_mosaic.version = 11 : i64} {
  func.func @_fused_both_nets_kernel(%arg0: i32, %arg1: memref<16x128xbf16, #tpu.memory_space<vmem>>, %arg2: memref<128x1024xbf16, #tpu.memory_space<vmem>>, %arg3: memref<1x1024xf32, #tpu.memory_space<vmem>>, %arg4: memref<2x512x256xbf16, #tpu.memory_space<vmem>>, %arg5: memref<2x1x256xf32, #tpu.memory_space<vmem>>, %arg6: memref<2x256x128xbf16, #tpu.memory_space<vmem>>, %arg7: memref<2x1x128xf32, #tpu.memory_space<vmem>>, %arg8: memref<16x256xf32, #tpu.memory_space<vmem>>) attributes {dimension_semantics = [#tpu.dimension_semantics<parallel>], iteration_bounds = array<i64: 1>, scalar_prefetch = 0 : i64, scratch_operands = 0 : i64, tpu.core_type = #tpu.core_type<tc>, window_params = [{transform_indices = @transform_0, window_bounds = array<i64: 16, 128>}, {pipeline_mode = #tpu.pipeline_mode<synchronous>, transform_indices = @transform_1, window_bounds = array<i64: 128, 1024>}, {pipeline_mode = #tpu.pipeline_mode<synchronous>, transform_indices = @transform_2, window_bounds = array<i64: 1, 1024>}, {pipeline_mode = #tpu.pipeline_mode<synchronous>, transform_indices = @transform_3, window_bounds = array<i64: 2, 512, 256>}, {pipeline_mode = #tpu.pipeline_mode<synchronous>, transform_indices = @transform_4, window_bounds = array<i64: 2, 1, 256>}, {pipeline_mode = #tpu.pipeline_mode<synchronous>, transform_indices = @transform_5, window_bounds = array<i64: 2, 256, 128>}, {pipeline_mode = #tpu.pipeline_mode<synchronous>, transform_indices = @transform_6, window_bounds = array<i64: 2, 1, 128>}, {transform_indices = @transform_7, window_bounds = array<i64: 16, 256>}]} {
    %c0 = arith.constant 0 : index
    %c0_0 = arith.constant 0 : index
    %0 = vector.load %arg1[%c0, %c0_0] : memref<16x128xbf16, #tpu.memory_space<vmem>>, vector<16x128xbf16>
    %c0_1 = arith.constant 0 : index
    %c0_2 = arith.constant 0 : index
    %1 = vector.load %arg2[%c0_1, %c0_2] : memref<128x1024xbf16, #tpu.memory_space<vmem>>, vector<128x1024xbf16>
    %cst = arith.constant dense<0.000000e+00> : vector<16x1024xf32>
    %2 = tpu.matmul %0, %1, %cst {dimension_numbers = #tpu.dot_dimension_numbers<[1], [0], [0], [1], [0, 0, 1, 1], [], []>} : vector<16x128xbf16>, vector<128x1024xbf16>, vector<16x1024xf32> -> vector<16x1024xf32>
    %c0_3 = arith.constant 0 : index
    %c0_4 = arith.constant 0 : index
    %3 = vector.load %arg3[%c0_3, %c0_4] : memref<1x1024xf32, #tpu.memory_space<vmem>>, vector<1x1024xf32>
    %4 = vector.broadcast %3 : vector<1x1024xf32> to vector<16x1024xf32>
    %5 = arith.addf %2, %4 : vector<16x1024xf32>
    %6 = math.tanh %5 : vector<16x1024xf32>
    %7 = arith.truncf %6 : vector<16x1024xf32> to vector<16x1024xbf16>
    %8 = vector.extract_strided_slice %7 {offsets = [0, 0], sizes = [16, 512], strides = [1, 1]} : vector<16x1024xbf16> to vector<16x512xbf16>
    %c0_5 = arith.constant 0 : index
    %c0_6 = arith.constant 0 : index
    %c0_7 = arith.constant 0 : index
    %9 = vector.load %arg4[%c0_5, %c0_6, %c0_7] : memref<2x512x256xbf16, #tpu.memory_space<vmem>>, vector<1x512x256xbf16>
    %10 = vector.shape_cast %9 : vector<1x512x256xbf16> to vector<512x256xbf16>
    %cst_8 = arith.constant dense<0.000000e+00> : vector<16x256xf32>
    %11 = tpu.matmul %8, %10, %cst_8 {dimension_numbers = #tpu.dot_dimension_numbers<[1], [0], [0], [1], [0, 0, 1, 1], [], []>} : vector<16x512xbf16>, vector<512x256xbf16>, vector<16x256xf32> -> vector<16x256xf32>
    %c0_9 = arith.constant 0 : index
    %c0_10 = arith.constant 0 : index
    %c0_11 = arith.constant 0 : index
    %12 = vector.load %arg5[%c0_9, %c0_10, %c0_11] : memref<2x1x256xf32, #tpu.memory_space<vmem>>, vector<1x1x256xf32>
    %13 = vector.shape_cast %12 : vector<1x1x256xf32> to vector<1x256xf32>
    %14 = vector.broadcast %13 : vector<1x256xf32> to vector<16x256xf32>
    %15 = arith.addf %11, %14 : vector<16x256xf32>
    %16 = math.tanh %15 : vector<16x256xf32>
    %17 = arith.truncf %16 : vector<16x256xf32> to vector<16x256xbf16>
    %c0_12 = arith.constant 0 : index
    %c0_13 = arith.constant 0 : index
    %c0_14 = arith.constant 0 : index
    %18 = vector.load %arg6[%c0_12, %c0_13, %c0_14] : memref<2x256x128xbf16, #tpu.memory_space<vmem>>, vector<1x256x128xbf16>
    %19 = vector.shape_cast %18 : vector<1x256x128xbf16> to vector<256x128xbf16>
    %cst_15 = arith.constant dense<0.000000e+00> : vector<16x128xf32>
    %20 = tpu.matmul %17, %19, %cst_15 {dimension_numbers = #tpu.dot_dimension_numbers<[1], [0], [0], [1], [0, 0, 1, 1], [], []>} : vector<16x256xbf16>, vector<256x128xbf16>, vector<16x128xf32> -> vector<16x128xf32>
    %c0_16 = arith.constant 0 : index
    %c0_17 = arith.constant 0 : index
    %c0_18 = arith.constant 0 : index
    %21 = vector.load %arg7[%c0_16, %c0_17, %c0_18] : memref<2x1x128xf32, #tpu.memory_space<vmem>>, vector<1x1x128xf32>
    %22 = vector.shape_cast %21 : vector<1x1x128xf32> to vector<1x128xf32>
    %23 = vector.broadcast %22 : vector<1x128xf32> to vector<16x128xf32>
    %24 = arith.addf %20, %23 : vector<16x128xf32>
    %25 = math.tanh %24 : vector<16x128xf32>
    %c0_19 = arith.constant 0 : index
    %c0_20 = arith.constant 0 : index
    %26 = vector.load %arg8[%c0_19, %c0_20] : memref<16x256xf32, #tpu.memory_space<vmem>>, vector<16x128xf32>
    tpu.vector_store %arg8[%c0_19, %c0_20], %25 {strides = array<i32>} : memref<16x256xf32, #tpu.memory_space<vmem>>, vector<16x128xf32>,
    %27 = vector.extract_strided_slice %7 {offsets = [0, 512], sizes = [16, 512], strides = [1, 1]} : vector<16x1024xbf16> to vector<16x512xbf16>
    %c1 = arith.constant 1 : index
    %c0_21 = arith.constant 0 : index
    %c0_22 = arith.constant 0 : index
    %28 = vector.load %arg4[%c1, %c0_21, %c0_22] : memref<2x512x256xbf16, #tpu.memory_space<vmem>>, vector<1x512x256xbf16>
    %29 = vector.shape_cast %28 : vector<1x512x256xbf16> to vector<512x256xbf16>
    %cst_23 = arith.constant dense<0.000000e+00> : vector<16x256xf32>
    %30 = tpu.matmul %27, %29, %cst_23 {dimension_numbers = #tpu.dot_dimension_numbers<[1], [0], [0], [1], [0, 0, 1, 1], [], []>} : vector<16x512xbf16>, vector<512x256xbf16>, vector<16x256xf32> -> vector<16x256xf32>
    %c1_24 = arith.constant 1 : index
    %c0_25 = arith.constant 0 : index
    %c0_26 = arith.constant 0 : index
    %31 = vector.load %arg5[%c1_24, %c0_25, %c0_26] : memref<2x1x256xf32, #tpu.memory_space<vmem>>, vector<1x1x256xf32>
    %32 = vector.shape_cast %31 : vector<1x1x256xf32> to vector<1x256xf32>
    %33 = vector.broadcast %32 : vector<1x256xf32> to vector<16x256xf32>
    %34 = arith.addf %30, %33 : vector<16x256xf32>
    %35 = math.tanh %34 : vector<16x256xf32>
    %36 = arith.truncf %35 : vector<16x256xf32> to vector<16x256xbf16>
    %c1_27 = arith.constant 1 : index
    %c0_28 = arith.constant 0 : index
    %c0_29 = arith.constant 0 : index
    %37 = vector.load %arg6[%c1_27, %c0_28, %c0_29] : memref<2x256x128xbf16, #tpu.memory_space<vmem>>, vector<1x256x128xbf16>
    %38 = vector.shape_cast %37 : vector<1x256x128xbf16> to vector<256x128xbf16>
    %cst_30 = arith.constant dense<0.000000e+00> : vector<16x128xf32>
    %39 = tpu.matmul %36, %38, %cst_30 {dimension_numbers = #tpu.dot_dimension_numbers<[1], [0], [0], [1], [0, 0, 1, 1], [], []>} : vector<16x256xbf16>, vector<256x128xbf16>, vector<16x128xf32> -> vector<16x128xf32>
    %c1_31 = arith.constant 1 : index
    %c0_32 = arith.constant 0 : index
    %c0_33 = arith.constant 0 : index
    %40 = vector.load %arg7[%c1_31, %c0_32, %c0_33] : memref<2x1x128xf32, #tpu.memory_space<vmem>>, vector<1x1x128xf32>
    %41 = vector.shape_cast %40 : vector<1x1x128xf32> to vector<1x128xf32>
    %42 = vector.broadcast %41 : vector<1x128xf32> to vector<16x128xf32>
    %43 = arith.addf %39, %42 : vector<16x128xf32>
    %44 = math.tanh %43 : vector<16x128xf32>
    %c0_34 = arith.constant 0 : index
    %c128 = arith.constant 128 : index
    %45 = vector.load %arg8[%c0_34, %c128] : memref<16x256xf32, #tpu.memory_space<vmem>>, vector<16x128xf32>
    tpu.vector_store %arg8[%c0_34, %c128], %44 {strides = array<i32>} : memref<16x256xf32, #tpu.memory_space<vmem>>, vector<16x128xf32>,
    return
  }
  func.func @transform_0(%arg0: i32) -> (i32, i32) {
    %c0_i32 = arith.constant 0 : i32
    %c0_i32_0 = arith.constant 0 : i32
    return %arg0, %c0_i32 : i32, i32
  }
  func.func @transform_1(%arg0: i32) -> (i32, i32) {
    %c0_i32 = arith.constant 0 : i32
    %c0_i32_0 = arith.constant 0 : i32
    %c0_i32_1 = arith.constant 0 : i32
    return %c0_i32, %c0_i32_0 : i32, i32
  }
  func.func @transform_2(%arg0: i32) -> (i32, i32) {
    %c0_i32 = arith.constant 0 : i32
    %c0_i32_0 = arith.constant 0 : i32
    %c0_i32_1 = arith.constant 0 : i32
    return %c0_i32, %c0_i32_0 : i32, i32
  }
  func.func @transform_3(%arg0: i32) -> (i32, i32, i32) {
    %c0_i32 = arith.constant 0 : i32
    %c0_i32_0 = arith.constant 0 : i32
    %c0_i32_1 = arith.constant 0 : i32
    %c0_i32_2 = arith.constant 0 : i32
    return %c0_i32, %c0_i32_0, %c0_i32_1 : i32, i32, i32
  }
  func.func @transform_4(%arg0: i32) -> (i32, i32, i32) {
    %c0_i32 = arith.constant 0 : i32
    %c0_i32_0 = arith.constant 0 : i32
    %c0_i32_1 = arith.constant 0 : i32
    %c0_i32_2 = arith.constant 0 : i32
    return %c0_i32, %c0_i32_0, %c0_i32_1 : i32, i32, i32
  }
  func.func @transform_5(%arg0: i32) -> (i32, i32, i32) {
    %c0_i32 = arith.constant 0 : i32
    %c0_i32_0 = arith.constant 0 : i32
    %c0_i32_1 = arith.constant 0 : i32
    %c0_i32_2 = arith.constant 0 : i32
    return %c0_i32, %c0_i32_0, %c0_i32_1 : i32, i32, i32
  }
  func.func @transform_6(%arg0: i32) -> (i32, i32, i32) {
    %c0_i32 = arith.constant 0 : i32
    %c0_i32_0 = arith.constant 0 : i32
    %c0_i32_1 = arith.constant 0 : i32
    %c0_i32_2 = arith.constant 0 : i32
    return %c0_i32, %c0_i32_0, %c0_i32_1 : i32, i32, i32
  }
  func.func @transform_7(%arg0: i32) -> (i32, i32) {
    %c0_i32 = arith.constant 0 : i32
    %c0_i32_0 = arith.constant 0 : i32
    return %arg0, %c0_i32 : i32, i32
  }
}

</mosaic_0001>

<llo_original>
// kernel: _forward_impl.1
$region0: #{_forward_impl.1}
  #allocation0 [shape = 'u32[]', space=smem, size = 0x4, offset = 0x4, fixed_abs, tag = 'smem constant byte address 0x4 - core index']
  #allocation1 [shape = 'u32[72,128]{1,0:T(1,128)}', space=vmem, size = 0x9000, scoped, tag = 'internal scratch']
  %s0 = inlined_call_operand.vmem [shape: bf16[16,128], index: 0, kind: input, shape index: {}]
  %s1 = inlined_call_operand.hbm [shape: bf16[128,1024], index: 1, kind: input, shape index: {}]
  %s2 = inlined_call_operand.vmem [shape: f32[1,1024], index: 2, kind: input, shape index: {}]
  %s3 = inlined_call_operand.hbm [shape: bf16[2,512,256], index: 3, kind: input, shape index: {}]
  %s4 = inlined_call_operand.vmem [shape: f32[2,1,256], index: 4, kind: input, shape index: {}]
  %s5 = inlined_call_operand.hbm [shape: bf16[2,256,128], index: 5, kind: input, shape index: {}]
  %s6 = inlined_call_operand.vmem [shape: f32[2,1,128], index: 6, kind: input, shape index: {}]
  %s7 = inlined_call_operand.vmem [shape: f32[16,256], index: 7, kind: output, shape index: {}]
  %s8 = sld [smem:[#allocation0]]
  $region50: #{_forward_impl.1} parent=0
    _
  %s10 = ssub.s32 1, %s8
  %s11 = scalar_select 0, %s10, %s8
  $region1: #{_forward_impl.1} parent=0
    #allocation2 [shape = 'u8[262144]{0}', space=vmem, size = 0x40000, scoped, tag = 'input window, operand 1, single buffered']
    #allocation3 [shape = 's32[1]{0}', space=sflag, size = 0x4, scoped, tag = 'scoped memory for _forward_impl.1']
    #allocation4 [shape = 'u8[524288]{0}', space=vmem, size = 0x80000, scoped, tag = 'input window, operand 3, single buffered']
    #allocation5 [shape = 's32[1]{0}', space=sflag, size = 0x4, scoped, tag = 'scoped memory for _forward_impl.1']
    #allocation6 [shape = 'u8[131072]{0}', space=vmem, size = 0x20000, scoped, tag = 'input window, operand 5, single buffered']
    %12 = vsyncpa [#allocation3], 0
    %13 = vsyncpa [#allocation5], 0
    // Predicated region
    $region2: #{_forward_impl.1} parent=1 // pred_check
      _
    $region3: #{_forward_impl.1} parent=1 // pred_check_branch
      %15 = sbr.rel (0) target = $region5
    $region4: #{_forward_impl.1} parent=1 // pred_region
      _
    $region5: #{_forward_impl.1} parent=1 // pred_fallthru
      _
    // Predicated region
    $region6: #{_forward_impl.1} parent=1 // pred_check
      _
    $region7: #{_forward_impl.1} parent=1 // pred_check_branch
      %17 = sbr.rel (0) target = $region9
    $region8: #{_forward_impl.1} parent=1 // pred_region
      %19 = vsyncadd [#allocation3], 0
      %s20 = sshll.u32 %s1, 4
      %s21 = int_to_ptr.hbm [resolvable:$true] %s20
      %s22 = sshll.u32 [#allocation2], 4
      %s23 = int_to_ptr.vmem [resolvable:$true] %s22
      %28 = dma.hbm_to_vmem [thread:$0]  %s21, 8192, %s23, [#allocation3], 512, 512, 32
    $region9: #{_forward_impl.1} parent=1 // pred_fallthru
      _
    // Predicated region
    $region10: #{_forward_impl.1} parent=1 // pred_check
      _
    $region11: #{_forward_impl.1} parent=1 // pred_check_branch
      %30 = sbr.rel (0) target = $region13
    $region12: #{_forward_impl.1} parent=1 // pred_region
      _
    $region13: #{_forward_impl.1} parent=1 // pred_fallthru
      _
    // Predicated region
    $region14: #{_forward_impl.1} parent=1 // pred_check
      _
    $region15: #{_forward_impl.1} parent=1 // pred_check_branch
      %32 = sbr.rel (0) target = $region17
    $region16: #{_forward_impl.1} parent=1 // pred_region
      %34 = vsyncadd [#allocation5], 0
      %s35 = sshll.u32 %s3, 4
      %s36 = int_to_ptr.hbm [resolvable:$true] %s35
      %s37 = sshll.u32 [#allocation4], 4
      %s38 = int_to_ptr.vmem [resolvable:$true] %s37
      %43 = dma.hbm_to_vmem [thread:$0]  %s36, 16384, %s38, [#allocation5], 128, 128, 8
    $region17: #{_forward_impl.1} parent=1 // pred_fallthru
      _
    // Predicated region
    $region18: #{_forward_impl.1} parent=1 // pred_check
      _
    $region19: #{_forward_impl.1} parent=1 // pred_check_branch
      %45 = sbr.rel (0) target = $region21
    $region20: #{_forward_impl.1} parent=1 // pred_region
      _
    $region21: #{_forward_impl.1} parent=1 // pred_fallthru
      _
    // Predicated region
    $region22: #{_forward_impl.1} parent=1 // pred_check
      _
    $region23: #{_forward_impl.1} parent=1 // pred_check_branch
      %47 = sbr.rel (0) target = $region25
    $region24: #{_forward_impl.1} parent=1 // pred_region
      %49 = vsyncadd [#allocation5], 0
      %s50 = sshll.u32 %s5, 4
      %s51 = int_to_ptr.hbm [resolvable:$true] %s50
      %s52 = sshll.u32 [#allocation6], 4
      %s53 = int_to_ptr.vmem [resolvable:$true] %s52
      %58 = dma.hbm_to_vmem [thread:$0]  %s51, 4096, %s53, [#allocation5], 64, 64, 4
    $region25: #{_forward_impl.1} parent=1 // pred_fallthru
      _
    // Predicated region
    $region26: #{_forward_impl.1} parent=1 // pred_check
      _
    $region27: #{_forward_impl.1} parent=1 // pred_check_branch
      %60 = sbr.rel (0) target = $region29
    $region28: #{_forward_impl.1} parent=1 // pred_region
      _
    $region29: #{_forward_impl.1} parent=1 // pred_fallthru
      _
    // Predicated region
    $region30: #{_forward_impl.1} parent=1 // pred_check
      _
    $region31: #{_forward_impl.1} parent=1 // pred_check_branch
      %62 = sbr.rel (0) target = $region33
    $region32: #{_forward_impl.1} parent=1 // pred_region
      %64 = dma.done [#allocation3], 8192
    $region33: #{_forward_impl.1} parent=1 // pred_fallthru
      _
    // Predicated region
    $region34: #{_forward_impl.1} parent=1 // pred_check
      _
    $region35: #{_forward_impl.1} parent=1 // pred_check_branch
      %66 = sbr.rel (0) target = $region37
    $region36: #{_forward_impl.1} parent=1 // pred_region
      %68 = dma.done [#allocation5], 16384
    $region37: #{_forward_impl.1} parent=1 // pred_fallthru
      _
    // Predicated region
    $region38: #{_forward_impl.1} parent=1 // pred_check
      _
    $region39: #{_forward_impl.1} parent=1 // pred_check_branch
      %70 = sbr.rel (0) target = $region41
    $region40: #{_forward_impl.1} parent=1 // pred_region
      %72 = dma.done [#allocation5], 4096
    $region41: #{_forward_impl.1} parent=1 // pred_fallthru
      _
    %v73 = vld [vmem:[%s0] sm:$0xf]
    %v74 = vld [vmem:[%s0 + $0x4] sm:$0xf]
    %v75 = vld [vmem:[#allocation2] sm:$0xff]
    %v76 = vld [vmem:[#allocation2 + $0x8] sm:$0xff]
    %v77 = vld [vmem:[#allocation2 + $0x10] sm:$0xff]
    %v78 = vld [vmem:[#allocation2 + $0x18] sm:$0xff]
    %v79 = vld [vmem:[#allocation2 + $0x20] sm:$0xff]
    %v80 = vld [vmem:[#allocation2 + $0x28] sm:$0xff]
    %v81 = vld [vmem:[#allocation2 + $0x30] sm:$0xff]
    %v82 = vld [vmem:[#allocation2 + $0x38] sm:$0xff]
    %v83 = vld [vmem:[#allocation2 + $0x40] sm:$0xff]
    %v84 = vld [vmem:[#allocation2 + $0x48] sm:$0xff]
    %v85 = vld [vmem:[#allocation2 + $0x50] sm:$0xff]
    %v86 = vld [vmem:[#allocation2 + $0x58] sm:$0xff]
    %v87 = vld [vmem:[#allocation2 + $0x60] sm:$0xff]
    %v88 = vld [vmem:[#allocation2 + $0x68] sm:$0xff]
    %v89 = vld [vmem:[#allocation2 + $0x70] sm:$0xff]
    %v90 = vld [vmem:[#allocation2 + $0x78] sm:$0xff]
    %v91 = vld [vmem:[#allocation2 + $0x80] sm:$0xff]
    %v92 = vld [vmem:[#allocation2 + $0x88] sm:$0xff]
    %v93 = vld [vmem:[#allocation2 + $0x90] sm:$0xff]
    %v94 = vld [vmem:[#allocation2 + $0x98] sm:$0xff]
    %v95 = vld [vmem:[#allocation2 + $0xa0] sm:$0xff]
    %v96 = vld [vmem:[#allocation2 + $0xa8] sm:$0xff]
    %v97 = vld [vmem:[#allocation2 + $0xb0] sm:$0xff]
    %v98 = vld [vmem:[#allocation2 + $0xb8] sm:$0xff]
    %v99 = vld [vmem:[#allocation2 + $0xc0] sm:$0xff]
    %v100 = vld [vmem:[#allocation2 + $0xc8] sm:$0xff]
    %v101 = vld [vmem:[#allocation2 + $0xd0] sm:$0xff]
    %v102 = vld [vmem:[#allocation2 + $0xd8] sm:$0xff]
    %v103 = vld [vmem:[#allocation2 + $0xe0] sm:$0xff]
    %v104 = vld [vmem:[#allocation2 + $0xe8] sm:$0xff]
    %v105 = vld [vmem:[#allocation2 + $0xf0] sm:$0xff]
    %v106 = vld [vmem:[#allocation2 + $0xf8] sm:$0xff]
    %v107 = vld [vmem:[#allocation2 + $0x100] sm:$0xff]
    %v108 = vld [vmem:[#allocation2 + $0x108] sm:$0xff]
    %v109 = vld [vmem:[#allocation2 + $0x110] sm:$0xff]
    %v110 = vld [vmem:[#allocation2 + $0x118] sm:$0xff]
    %v111 = vld [vmem:[#allocation2 + $0x120] sm:$0xff]
    %v112 = vld [vmem:[#allocation2 + $0x128] sm:$0xff]
    %v113 = vld [vmem:[#allocation2 + $0x130] sm:$0xff]
    %v114 = vld [vmem:[#allocation2 + $0x138] sm:$0xff]
    %v115 = vld [vmem:[#allocation2 + $0x140] sm:$0xff]
    %v116 = vld [vmem:[#allocation2 + $0x148] sm:$0xff]
    %v117 = vld [vmem:[#allocation2 + $0x150] sm:$0xff]
    %v118 = vld [vmem:[#allocation2 + $0x158] sm:$0xff]
    %v119 = vld [vmem:[#allocation2 + $0x160] sm:$0xff]
    %v120 = vld [vmem:[#allocation2 + $0x168] sm:$0xff]
    %v121 = vld [vmem:[#allocation2 + $0x170] sm:$0xff]
    %v122 = vld [vmem:[#allocation2 + $0x178] sm:$0xff]
    %v123 = vld [vmem:[#allocation2 + $0x180] sm:$0xff]
    %v124 = vld [vmem:[#allocation2 + $0x188] sm:$0xff]
    %v125 = vld [vmem:[#allocation2 + $0x190] sm:$0xff]
    %v126 = vld [vmem:[#allocation2 + $0x198] sm:$0xff]
    %v127 = vld [vmem:[#allocation2 + $0x1a0] sm:$0xff]
    %v128 = vld [vmem:[#allocation2 + $0x1a8] sm:$0xff]
    %v129 = vld [vmem:[#allocation2 + $0x1b0] sm:$0xff]
    %v130 = vld [vmem:[#allocation2 + $0x1b8] sm:$0xff]
    %v131 = vld [vmem:[#allocation2 + $0x1c0] sm:$0xff]
    %v132 = vld [vmem:[#allocation2 + $0x1c8] sm:$0xff]
    %v133 = vld [vmem:[#allocation2 + $0x1d0] sm:$0xff]
    %v134 = vld [vmem:[#allocation2 + $0x1d8] sm:$0xff]
    %v135 = vld [vmem:[#allocation2 + $0x1e0] sm:$0xff]
    %v136 = vld [vmem:[#allocation2 + $0x1e8] sm:$0xff]
    %v137 = vld [vmem:[#allocation2 + $0x1f0] sm:$0xff]
    %v138 = vld [vmem:[#allocation2 + $0x1f8] sm:$0xff]
    %v139 = vld [vmem:[%s2] sm:$0xff]
    %v141 = vperm.slane %v139, 0
    %v142 = vperm.slane %v139, 1
    %v143 = vperm.slane %v139, 2
    %v144 = vperm.slane %v139, 3
    %v145 = vperm.slane %v139, 4
    %v146 = vperm.slane %v139, 5
    %v147 = vperm.slane %v139, 6
    %v148 = vperm.slane %v139, 7
    %v159 = vunpack.c.l.b16 %v73
    %v160 = vunpack.c.l.b16 %v74
    %v161 = vpack.c.b16 %v160, %v159
    %v227 = vunpack.c.l.b16 %v75
    %v228 = vunpack.c.h.b16 %v75
    %v229 = vunpack.c.l.b16 %v76
    %v230 = vunpack.c.h.b16 %v76
    %v231 = vunpack.c.l.b16 %v77
    %v232 = vunpack.c.h.b16 %v77
    %v233 = vunpack.c.l.b16 %v78
    %v234 = vunpack.c.h.b16 %v78
    %v235 = vunpack.c.l.b16 %v79
    %v236 = vunpack.c.h.b16 %v79
    %v237 = vunpack.c.l.b16 %v80
    %v238 = vunpack.c.h.b16 %v80
    %v239 = vunpack.c.l.b16 %v81
    %v240 = vunpack.c.h.b16 %v81
    %v241 = vunpack.c.l.b16 %v82
    %v242 = vunpack.c.h.b16 %v82
    %v243 = vunpack.c.l.b16 %v83
    %v244 = vunpack.c.h.b16 %v83
    %v245 = vunpack.c.l.b16 %v84
    %v246 = vunpack.c.h.b16 %v84
    %v247 = vunpack.c.l.b16 %v85
    %v248 = vunpack.c.h.b16 %v85
    %v249 = vunpack.c.l.b16 %v86
    %v250 = vunpack.c.h.b16 %v86
    %v251 = vunpack.c.l.b16 %v87
    %v252 = vunpack.c.h.b16 %v87
    %v253 = vunpack.c.l.b16 %v88
    %v254 = vunpack.c.h.b16 %v88
    %v255 = vunpack.c.l.b16 %v89
    %v256 = vunpack.c.h.b16 %v89
    %v257 = vunpack.c.l.b16 %v90
    %v258 = vunpack.c.h.b16 %v90
    %v259 = vunpack.c.l.b16 %v91
    %v260 = vunpack.c.h.b16 %v91
    %v261 = vunpack.c.l.b16 %v92
    %v262 = vunpack.c.h.b16 %v92
    %v263 = vunpack.c.l.b16 %v93
    %v264 = vunpack.c.h.b16 %v93
    %v265 = vunpack.c.l.b16 %v94
    %v266 = vunpack.c.h.b16 %v94
    %v267 = vunpack.c.l.b16 %v95
    %v268 = vunpack.c.h.b16 %v95
    %v269 = vunpack.c.l.b16 %v96
    %v270 = vunpack.c.h.b16 %v96
    %v271 = vunpack.c.l.b16 %v97
    %v272 = vunpack.c.h.b16 %v97
    %v273 = vunpack.c.l.b16 %v98
    %v274 = vunpack.c.h.b16 %v98
    %v275 = vunpack.c.l.b16 %v99
    %v276 = vunpack.c.h.b16 %v99
    %v277 = vunpack.c.l.b16 %v100
    %v278 = vunpack.c.h.b16 %v100
    %v279 = vunpack.c.l.b16 %v101
    %v280 = vunpack.c.h.b16 %v101
    %v281 = vunpack.c.l.b16 %v102
    %v282 = vunpack.c.h.b16 %v102
    %v283 = vunpack.c.l.b16 %v103
    %v284 = vunpack.c.h.b16 %v103
    %v285 = vunpack.c.l.b16 %v104
    %v286 = vunpack.c.h.b16 %v104
    %v287 = vunpack.c.l.b16 %v105
    %v288 = vunpack.c.h.b16 %v105
    %v289 = vunpack.c.l.b16 %v106
    %v290 = vunpack.c.h.b16 %v106
    %v291 = vunpack.c.l.b16 %v107
    %v292 = vunpack.c.h.b16 %v107
    %v293 = vunpack.c.l.b16 %v108
    %v294 = vunpack.c.h.b16 %v108
    %v295 = vunpack.c.l.b16 %v109
    %v296 = vunpack.c.h.b16 %v109
    %v297 = vunpack.c.l.b16 %v110
    %v298 = vunpack.c.h.b16 %v110
    %v299 = vunpack.c.l.b16 %v111
    %v300 = vunpack.c.h.b16 %v111
    %v301 = vunpack.c.l.b16 %v112
    %v302 = vunpack.c.h.b16 %v112
    %v303 = vunpack.c.l.b16 %v113
    %v304 = vunpack.c.h.b16 %v113
    %v305 = vunpack.c.l.b16 %v114
    %v306 = vunpack.c.h.b16 %v114
    %v307 = vunpack.c.l.b16 %v115
    %v308 = vunpack.c.h.b16 %v115
    %v309 = vunpack.c.l.b16 %v116
    %v310 = vunpack.c.h.b16 %v116
    %v311 = vunpack.c.l.b16 %v117
    %v312 = vunpack.c.h.b16 %v117
    %v313 = vunpack.c.l.b16 %v118
    %v314 = vunpack.c.h.b16 %v118
    %v315 = vunpack.c.l.b16 %v119
    %v316 = vunpack.c.h.b16 %v119
    %v317 = vunpack.c.l.b16 %v120
    %v318 = vunpack.c.h.b16 %v120
    %v319 = vunpack.c.l.b16 %v121
    %v320 = vunpack.c.h.b16 %v121
    %v321 = vunpack.c.l.b16 %v122
    %v322 = vunpack.c.h.b16 %v122
    %v323 = vunpack.c.l.b16 %v123
    %v324 = vunpack.c.h.b16 %v123
    %v325 = vunpack.c.l.b16 %v124
    %v326 = vunpack.c.h.b16 %v124
    %v327 = vunpack.c.l.b16 %v125
    %v328 = vunpack.c.h.b16 %v125
    %v329 = vunpack.c.l.b16 %v126
    %v330 = vunpack.c.h.b16 %v126
    %v331 = vunpack.c.l.b16 %v127
    %v332 = vunpack.c.h.b16 %v127
    %v333 = vunpack.c.l.b16 %v128
    %v334 = vunpack.c.h.b16 %v128
    %v335 = vunpack.c.l.b16 %v129
    %v336 = vunpack.c.h.b16 %v129
    %v337 = vunpack.c.l.b16 %v130
    %v338 = vunpack.c.h.b16 %v130
    %v339 = vunpack.c.l.b16 %v131
    %v340 = vunpack.c.h.b16 %v131
    %v341 = vunpack.c.l.b16 %v132
    %v342 = vunpack.c.h.b16 %v132
    %v343 = vunpack.c.l.b16 %v133
    %v344 = vunpack.c.h.b16 %v133
    %v345 = vunpack.c.l.b16 %v134
    %v346 = vunpack.c.h.b16 %v134
    %v347 = vunpack.c.l.b16 %v135
    %v348 = vunpack.c.h.b16 %v135
    %v349 = vunpack.c.l.b16 %v136
    %v350 = vunpack.c.h.b16 %v136
    %v351 = vunpack.c.l.b16 %v137
    %v352 = vunpack.c.h.b16 %v137
    %v353 = vunpack.c.l.b16 %v138
    %v354 = vunpack.c.h.b16 %v138
    %v355 = vpack.c.b16 %v235, %v227
    %v356 = vpack.c.b16 %v236, %v228
    %v357 = vpack.c.b16 %v237, %v229
    %v358 = vpack.c.b16 %v238, %v230
    %v359 = vpack.c.b16 %v239, %v231
    %v360 = vpack.c.b16 %v240, %v232
    %v361 = vpack.c.b16 %v241, %v233
    %v362 = vpack.c.b16 %v242, %v234
    %v363 = vpack.c.b16 %v251, %v243
    %v364 = vpack.c.b16 %v252, %v244
    %v365 = vpack.c.b16 %v253, %v245
    %v366 = vpack.c.b16 %v254, %v246
    %v367 = vpack.c.b16 %v255, %v247
    %v368 = vpack.c.b16 %v256, %v248
    %v369 = vpack.c.b16 %v257, %v249
    %v370 = vpack.c.b16 %v258, %v250
    %v371 = vpack.c.b16 %v267, %v259
    %v372 = vpack.c.b16 %v268, %v260
    %v373 = vpack.c.b16 %v269, %v261
    %v374 = vpack.c.b16 %v270, %v262
    %v375 = vpack.c.b16 %v271, %v263
    %v376 = vpack.c.b16 %v272, %v264
    %v377 = vpack.c.b16 %v273, %v265
    %v378 = vpack.c.b16 %v274, %v266
    %v379 = vpack.c.b16 %v283, %v275
    %v380 = vpack.c.b16 %v284, %v276
    %v381 = vpack.c.b16 %v285, %v277
    %v382 = vpack.c.b16 %v286, %v278
    %v383 = vpack.c.b16 %v287, %v279
    %v384 = vpack.c.b16 %v288, %v280
    %v385 = vpack.c.b16 %v289, %v281
    %v386 = vpack.c.b16 %v290, %v282
    %v387 = vpack.c.b16 %v299, %v291
    %v388 = vpack.c.b16 %v300, %v292
    %v389 = vpack.c.b16 %v301, %v293
    %v390 = vpack.c.b16 %v302, %v294
    %v391 = vpack.c.b16 %v303, %v295
    %v392 = vpack.c.b16 %v304, %v296
    %v393 = vpack.c.b16 %v305, %v297
    %v394 = vpack.c.b16 %v306, %v298
    %v395 = vpack.c.b16 %v315, %v307
    %v396 = vpack.c.b16 %v316, %v308
    %v397 = vpack.c.b16 %v317, %v309
    %v398 = vpack.c.b16 %v318, %v310
    %v399 = vpack.c.b16 %v319, %v311
    %v400 = vpack.c.b16 %v320, %v312
    %v401 = vpack.c.b16 %v321, %v313
    %v402 = vpack.c.b16 %v322, %v314
    %v403 = vpack.c.b16 %v331, %v323
    %v404 = vpack.c.b16 %v332, %v324
    %v405 = vpack.c.b16 %v333, %v325
    %v406 = vpack.c.b16 %v334, %v326
    %v407 = vpack.c.b16 %v335, %v327
    %v408 = vpack.c.b16 %v336, %v328
    %v409 = vpack.c.b16 %v337, %v329
    %v410 = vpack.c.b16 %v338, %v330
    %v411 = vpack.c.b16 %v347, %v339
    %v412 = vpack.c.b16 %v348, %v340
    %v413 = vpack.c.b16 %v349, %v341
    %v414 = vpack.c.b16 %v350, %v342
    %v415 = vpack.c.b16 %v351, %v343
    %v416 = vpack.c.b16 %v352, %v344
    %v417 = vpack.c.b16 %v353, %v345
    %v418 = vpack.c.b16 %v354, %v346
    %483 = vmatpush.bf16.msra.mxu0 %v411
    %484 = vmatpush.bf16.msra.mxu0 %v403
    %485 = vmatpush.bf16.msra.mxu0 %v395
    %486 = vmatpush.bf16.msra.mxu0 %v387
    %487 = vmatpush.bf16.msra.mxu0 %v379
    %488 = vmatpush.bf16.msra.mxu0 %v371
    %489 = vmatpush.bf16.msra.mxu0 %v363
    %490 = vmatpush.bf16.msra.mxu0 %v355
    %491 = vmatmul.bf16.gmra.mxu0 %v161
    %v492 = vpop.f32.mrf.mxu0
    %v493 = vadd.f32 %v141, %v492
    %v494 = vpop.f32.mrf.mxu0
    %v495 = vadd.f32 %v141, %v494
    %496 = vdwg.mxu0
    %497 = vmatpush.bf16.msra.mxu0 %v412
    %498 = vmatpush.bf16.msra.mxu0 %v404
    %499 = vmatpush.bf16.msra.mxu0 %v396
    %500 = vmatpush.bf16.msra.mxu0 %v388
    %501 = vmatpush.bf16.msra.mxu0 %v380
    %502 = vmatpush.bf16.msra.mxu0 %v372
    %503 = vmatpush.bf16.msra.mxu0 %v364
    %504 = vmatpush.bf16.msra.mxu0 %v356
    %505 = vmatmul.bf16.gmra.mxu0 %v161
    %v506 = vpop.f32.mrf.mxu0
    %v507 = vadd.f32 %v142, %v506
    %v508 = vpop.f32.mrf.mxu0
    %v509 = vadd.f32 %v142, %v508
    %510 = vdwg.mxu0
    %511 = vmatpush.bf16.msra.mxu0 %v413
    %512 = vmatpush.bf16.msra.mxu0 %v405
    %513 = vmatpush.bf16.msra.mxu0 %v397
    %514 = vmatpush.bf16.msra.mxu0 %v389
    %515 = vmatpush.bf16.msra.mxu0 %v381
    %516 = vmatpush.bf16.msra.mxu0 %v373
    %517 = vmatpush.bf16.msra.mxu0 %v365
    %518 = vmatpush.bf16.msra.mxu0 %v357
    %519 = vmatmul.bf16.gmra.mxu0 %v161
    %v520 = vpop.f32.mrf.mxu0
    %v521 = vadd.f32 %v143, %v520
    %v522 = vpop.f32.mrf.mxu0
    %v523 = vadd.f32 %v143, %v522
    %524 = vdwg.mxu0
    %525 = vmatpush.bf16.msra.mxu0 %v414
    %526 = vmatpush.bf16.msra.mxu0 %v406
    %527 = vmatpush.bf16.msra.mxu0 %v398
    %528 = vmatpush.bf16.msra.mxu0 %v390
    %529 = vmatpush.bf16.msra.mxu0 %v382
    %530 = vmatpush.bf16.msra.mxu0 %v374
    %531 = vmatpush.bf16.msra.mxu0 %v366
    %532 = vmatpush.bf16.msra.mxu0 %v358
    %533 = vmatmul.bf16.gmra.mxu0 %v161
    %v534 = vpop.f32.mrf.mxu0
    %v535 = vadd.f32 %v144, %v534
    %v536 = vpop.f32.mrf.mxu0
    %v537 = vadd.f32 %v144, %v536
    %538 = vdwg.mxu0
    %539 = vmatpush.bf16.msra.mxu0 %v415
    %540 = vmatpush.bf16.msra.mxu0 %v407
    %541 = vmatpush.bf16.msra.mxu0 %v399
    %542 = vmatpush.bf16.msra.mxu0 %v391
    %543 = vmatpush.bf16.msra.mxu0 %v383
    %544 = vmatpush.bf16.msra.mxu0 %v375
    %545 = vmatpush.bf16.msra.mxu0 %v367
    %546 = vmatpush.bf16.msra.mxu0 %v359
    %547 = vmatmul.bf16.gmra.mxu0 %v161
    %v548 = vpop.f32.mrf.mxu0
    %v549 = vadd.f32 %v145, %v548
    %v550 = vpop.f32.mrf.mxu0
    %v551 = vadd.f32 %v145, %v550
    %552 = vdwg.mxu0
    %553 = vmatpush.bf16.msra.mxu0 %v416
    %554 = vmatpush.bf16.msra.mxu0 %v408
    %555 = vmatpush.bf16.msra.mxu0 %v400
    %556 = vmatpush.bf16.msra.mxu0 %v392
    %557 = vmatpush.bf16.msra.mxu0 %v384
    %558 = vmatpush.bf16.msra.mxu0 %v376
    %559 = vmatpush.bf16.msra.mxu0 %v368
    %560 = vmatpush.bf16.msra.mxu0 %v360
    %561 = vmatmul.bf16.gmra.mxu0 %v161
    %v562 = vpop.f32.mrf.mxu0
    %v563 = vadd.f32 %v146, %v562
    %v564 = vpop.f32.mrf.mxu0
    %v565 = vadd.f32 %v146, %v564
    %566 = vdwg.mxu0
    %567 = vmatpush.bf16.msra.mxu0 %v417
    %568 = vmatpush.bf16.msra.mxu0 %v409
    %569 = vmatpush.bf16.msra.mxu0 %v401
    %570 = vmatpush.bf16.msra.mxu0 %v393
    %571 = vmatpush.bf16.msra.mxu0 %v385
    %572 = vmatpush.bf16.msra.mxu0 %v377
    %573 = vmatpush.bf16.msra.mxu0 %v369
    %574 = vmatpush.bf16.msra.mxu0 %v361
    %575 = vmatmul.bf16.gmra.mxu0 %v161
    %v576 = vpop.f32.mrf.mxu0
    %v577 = vadd.f32 %v147, %v576
    %v578 = vpop.f32.mrf.mxu0
    %v579 = vadd.f32 %v147, %v578
    %580 = vdwg.mxu0
    %581 = vmatpush.bf16.msra.mxu0 %v418
    %582 = vmatpush.bf16.msra.mxu0 %v410
    %583 = vmatpush.bf16.msra.mxu0 %v402
    %584 = vmatpush.bf16.msra.mxu0 %v394
    %585 = vmatpush.bf16.msra.mxu0 %v386
    %586 = vmatpush.bf16.msra.mxu0 %v378
    %587 = vmatpush.bf16.msra.mxu0 %v370
    %588 = vmatpush.bf16.msra.mxu0 %v362
    %589 = vmatmul.bf16.gmra.mxu0 %v161
    %v590 = vpop.f32.mrf.mxu0
    %v591 = vadd.f32 %v148, %v590
    %v592 = vpop.f32.mrf.mxu0
    %v593 = vadd.f32 %v148, %v592
    %594 = vdwg.mxu0
    %v595 = vtanh.pop %v493
    %v596 = vtanh.pop %v507
    %v597 = vtanh.pop %v521
    %v598 = vtanh.pop %v535
    %v599 = vtanh.pop %v549
    %v600 = vtanh.pop %v563
    %v601 = vtanh.pop %v577
    %v602 = vtanh.pop %v591
    %v603 = vtanh.pop %v495
    %v604 = vtanh.pop %v509
    %v605 = vtanh.pop %v523
    %v606 = vtanh.pop %v537
    %v607 = vtanh.pop %v551
    %v608 = vtanh.pop %v565
    %v609 = vtanh.pop %v579
    %v610 = vtanh.pop %v593
    %v611 = vpack.c.bf16 %v596, %v595
    %v612 = vpack.c.bf16 %v598, %v597
    %v613 = vpack.c.bf16 %v600, %v599
    %v614 = vpack.c.bf16 %v602, %v601
    %v615 = vpack.c.bf16 %v604, %v603
    %v616 = vpack.c.bf16 %v606, %v605
    %v617 = vpack.c.bf16 %v608, %v607
    %v618 = vpack.c.bf16 %v610, %v609
    %v619 = vld [vmem:[#allocation4] sm:$0xff]
    %v620 = vld [vmem:[#allocation4 + $0x8] sm:$0xff]
    %v621 = vld [vmem:[#allocation4 + $0x10] sm:$0xff]
    %v622 = vld [vmem:[#allocation4 + $0x18] sm:$0xff]
    %v623 = vld [vmem:[#allocation4 + $0x20] sm:$0xff]
    %v624 = vld [vmem:[#allocation4 + $0x28] sm:$0xff]
    %v625 = vld [vmem:[#allocation4 + $0x30] sm:$0xff]
    %v626 = vld [vmem:[#allocation4 + $0x38] sm:$0xff]
    %v627 = vld [vmem:[#allocation4 + $0x40] sm:$0xff]
    %v628 = vld [vmem:[#allocation4 + $0x48] sm:$0xff]
    %v629 = vld [vmem:[#allocation4 + $0x50] sm:$0xff]
    %v630 = vld [vmem:[#allocation4 + $0x58] sm:$0xff]
    %v631 = vld [vmem:[#allocation4 + $0x60] sm:$0xff]
    %v632 = vld [vmem:[#allocation4 + $0x68] sm:$0xff]
    %v633 = vld [vmem:[#allocation4 + $0x70] sm:$0xff]
    %v634 = vld [vmem:[#allocation4 + $0x78] sm:$0xff]
    %v635 = vld [vmem:[#allocation4 + $0x80] sm:$0xff]
    %v636 = vld [vmem:[#allocation4 + $0x88] sm:$0xff]
    %v637 = vld [vmem:[#allocation4 + $0x90] sm:$0xff]
    %v638 = vld [vmem:[#allocation4 + $0x98] sm:$0xff]
    %v639 = vld [vmem:[#allocation4 + $0xa0] sm:$0xff]
    %v640 = vld [vmem:[#allocation4 + $0xa8] sm:$0xff]
    %v641 = vld [vmem:[#allocation4 + $0xb0] sm:$0xff]
    %v642 = vld [vmem:[#allocation4 + $0xb8] sm:$0xff]
    %v643 = vld [vmem:[#allocation4 + $0xc0] sm:$0xff]
    %v644 = vld [vmem:[#allocation4 + $0xc8] sm:$0xff]
    %v645 = vld [vmem:[#allocation4 + $0xd0] sm:$0xff]
    %v646 = vld [vmem:[#allocation4 + $0xd8] sm:$0xff]
    %v647 = vld [vmem:[#allocation4 + $0xe0] sm:$0xff]
    %v648 = vld [vmem:[#allocation4 + $0xe8] sm:$0xff]
    %v649 = vld [vmem:[#allocation4 + $0xf0] sm:$0xff]
    %v650 = vld [vmem:[#allocation4 + $0xf8] sm:$0xff]
    %v651 = vld [vmem:[#allocation4 + $0x100] sm:$0xff]
    %v652 = vld [vmem:[#allocation4 + $0x108] sm:$0xff]
    %v653 = vld [vmem:[#allocation4 + $0x110] sm:$0xff]
    %v654 = vld [vmem:[#allocation4 + $0x118] sm:$0xff]
    %v655 = vld [vmem:[#allocation4 + $0x120] sm:$0xff]
    %v656 = vld [vmem:[#allocation4 + $0x128] sm:$0xff]
    %v657 = vld [vmem:[#allocation4 + $0x130] sm:$0xff]
    %v658 = vld [vmem:[#allocation4 + $0x138] sm:$0xff]
    %v659 = vld [vmem:[#allocation4 + $0x140] sm:$0xff]
    %v660 = vld [vmem:[#allocation4 + $0x148] sm:$0xff]
    %v661 = vld [vmem:[#allocation4 + $0x150] sm:$0xff]
    %v662 = vld [vmem:[#allocation4 + $0x158] sm:$0xff]
    %v663 = vld [vmem:[#allocation4 + $0x160] sm:$0xff]
    %v664 = vld [vmem:[#allocation4 + $0x168] sm:$0xff]
    %v665 = vld [vmem:[#allocation4 + $0x170] sm:$0xff]
    %v666 = vld [vmem:[#allocation4 + $0x178] sm:$0xff]
    %v667 = vld [vmem:[#allocation4 + $0x180] sm:$0xff]
    %v668 = vld [vmem:[#allocation4 + $0x188] sm:$0xff]
    %v669 = vld [vmem:[#allocation4 + $0x190] sm:$0xff]
    %v670 = vld [vmem:[#allocation4 + $0x198] sm:$0xff]
    %v671 = vld [vmem:[#allocation4 + $0x1a0] sm:$0xff]
    %v672 = vld [vmem:[#allocation4 + $0x1a8] sm:$0xff]
    %v673 = vld [vmem:[#allocation4 + $0x1b0] sm:$0xff]
    %v674 = vld [vmem:[#allocation4 + $0x1b8] sm:$0xff]
    %v675 = vld [vmem:[#allocation4 + $0x1c0] sm:$0xff]
    %v676 = vld [vmem:[#allocation4 + $0x1c8] sm:$0xff]
    %v677 = vld [vmem:[#allocation4 + $0x1d0] sm:$0xff]
    %v678 = vld [vmem:[#allocation4 + $0x1d8] sm:$0xff]
    %v679 = vld [vmem:[#allocation4 + $0x1e0] sm:$0xff]
    %v680 = vld [vmem:[#allocation4 + $0x1e8] sm:$0xff]
    %v681 = vld [vmem:[#allocation4 + $0x1f0] sm:$0xff]
    %v682 = vld [vmem:[#allocation4 + $0x1f8] sm:$0xff]
    %v683 = vld [vmem:[%s4] sm:$0x3]
    %v685 = vperm.slane %v683, 0
    %v686 = vperm.slane %v683, 1
    %v693 = vunpack.c.l.b16 %v611
    %v694 = vunpack.c.h.b16 %v611
    %v695 = vunpack.c.l.b16 %v612
    %v696 = vunpack.c.h.b16 %v612
    %v697 = vunpack.c.l.b16 %v615
    %v698 = vunpack.c.h.b16 %v615
    %v699 = vunpack.c.l.b16 %v616
    %v700 = vunpack.c.h.b16 %v616
    %v701 = vpack.c.b16 %v697, %v693
    %v702 = vpack.c.b16 %v698, %v694
    %v703 = vpack.c.b16 %v699, %v695
    %v704 = vpack.c.b16 %v700, %v696
    %v773 = vunpack.c.l.b16 %v619
    %v774 = vunpack.c.h.b16 %v619
    %v775 = vunpack.c.l.b16 %v620
    %v776 = vunpack.c.h.b16 %v620
    %v777 = vunpack.c.l.b16 %v621
    %v778 = vunpack.c.h.b16 %v621
    %v779 = vunpack.c.l.b16 %v622
    %v780 = vunpack.c.h.b16 %v622
    %v781 = vunpack.c.l.b16 %v623
    %v782 = vunpack.c.h.b16 %v623
    %v783 = vunpack.c.l.b16 %v624
    %v784 = vunpack.c.h.b16 %v624
    %v785 = vunpack.c.l.b16 %v625
    %v786 = vunpack.c.h.b16 %v625
    %v787 = vunpack.c.l.b16 %v626
    %v788 = vunpack.c.h.b16 %v626
    %v789 = vunpack.c.l.b16 %v627
    %v790 = vunpack.c.h.b16 %v627
    %v791 = vunpack.c.l.b16 %v628
    %v792 = vunpack.c.h.b16 %v628
    %v793 = vunpack.c.l.b16 %v629
    %v794 = vunpack.c.h.b16 %v629
    %v795 = vunpack.c.l.b16 %v630
    %v796 = vunpack.c.h.b16 %v630
    %v797 = vunpack.c.l.b16 %v631
    %v798 = vunpack.c.h.b16 %v631
    %v799 = vunpack.c.l.b16 %v632
    %v800 = vunpack.c.h.b16 %v632
    %v801 = vunpack.c.l.b16 %v633
    %v802 = vunpack.c.h.b16 %v633
    %v803 = vunpack.c.l.b16 %v634
    %v804 = vunpack.c.h.b16 %v634
    %v805 = vunpack.c.l.b16 %v635
    %v806 = vunpack.c.h.b16 %v635
    %v807 = vunpack.c.l.b16 %v636
    %v808 = vunpack.c.h.b16 %v636
    %v809 = vunpack.c.l.b16 %v637
    %v810 = vunpack.c.h.b16 %v637
    %v811 = vunpack.c.l.b16 %v638
    %v812 = vunpack.c.h.b16 %v638
    %v813 = vunpack.c.l.b16 %v639
    %v814 = vunpack.c.h.b16 %v639
    %v815 = vunpack.c.l.b16 %v640
    %v816 = vunpack.c.h.b16 %v640
    %v817 = vunpack.c.l.b16 %v641
    %v818 = vunpack.c.h.b16 %v641
    %v819 = vunpack.c.l.b16 %v642
    %v820 = vunpack.c.h.b16 %v642
    %v821 = vunpack.c.l.b16 %v643
    %v822 = vunpack.c.h.b16 %v643
    %v823 = vunpack.c.l.b16 %v644
    %v824 = vunpack.c.h.b16 %v644
    %v825 = vunpack.c.l.b16 %v645
    %v826 = vunpack.c.h.b16 %v645
    %v827 = vunpack.c.l.b16 %v646
    %v828 = vunpack.c.h.b16 %v646
    %v829 = vunpack.c.l.b16 %v647
    %v830 = vunpack.c.h.b16 %v647
    %v831 = vunpack.c.l.b16 %v648
    %v832 = vunpack.c.h.b16 %v648
    %v833 = vunpack.c.l.b16 %v649
    %v834 = vunpack.c.h.b16 %v649
    %v835 = vunpack.c.l.b16 %v650
    %v836 = vunpack.c.h.b16 %v650
    %v837 = vunpack.c.l.b16 %v651
    %v838 = vunpack.c.h.b16 %v651
    %v839 = vunpack.c.l.b16 %v652
    %v840 = vunpack.c.h.b16 %v652
    %v841 = vunpack.c.l.b16 %v653
    %v842 = vunpack.c.h.b16 %v653
    %v843 = vunpack.c.l.b16 %v654
    %v844 = vunpack.c.h.b16 %v654
    %v845 = vunpack.c.l.b16 %v655
    %v846 = vunpack.c.h.b16 %v655
    %v847 = vunpack.c.l.b16 %v656
    %v848 = vunpack.c.h.b16 %v656
    %v849 = vunpack.c.l.b16 %v657
    %v850 = vunpack.c.h.b16 %v657
    %v851 = vunpack.c.l.b16 %v658
    %v852 = vunpack.c.h.b16 %v658
    %v853 = vunpack.c.l.b16 %v659
    %v854 = vunpack.c.h.b16 %v659
    %v855 = vunpack.c.l.b16 %v660
    %v856 = vunpack.c.h.b16 %v660
    %v857 = vunpack.c.l.b16 %v661
    %v858 = vunpack.c.h.b16 %v661
    %v859 = vunpack.c.l.b16 %v662
    %v860 = vunpack.c.h.b16 %v662
    %v861 = vunpack.c.l.b16 %v663
    %v862 = vunpack.c.h.b16 %v663
    %v863 = vunpack.c.l.b16 %v664
    %v864 = vunpack.c.h.b16 %v664
    %v865 = vunpack.c.l.b16 %v665
    %v866 = vunpack.c.h.b16 %v665
    %v867 = vunpack.c.l.b16 %v666
    %v868 = vunpack.c.h.b16 %v666
    %v869 = vunpack.c.l.b16 %v667
    %v870 = vunpack.c.h.b16 %v667
    %v871 = vunpack.c.l.b16 %v668
    %v872 = vunpack.c.h.b16 %v668
    %v873 = vunpack.c.l.b16 %v669
    %v874 = vunpack.c.h.b16 %v669
    %v875 = vunpack.c.l.b16 %v670
    %v876 = vunpack.c.h.b16 %v670
    %v877 = vunpack.c.l.b16 %v671
    %v878 = vunpack.c.h.b16 %v671
    %v879 = vunpack.c.l.b16 %v672
    %v880 = vunpack.c.h.b16 %v672
    %v881 = vunpack.c.l.b16 %v673
    %v882 = vunpack.c.h.b16 %v673
    %v883 = vunpack.c.l.b16 %v674
    %v884 = vunpack.c.h.b16 %v674
    %v885 = vunpack.c.l.b16 %v675
    %v886 = vunpack.c.h.b16 %v675
    %v887 = vunpack.c.l.b16 %v676
    %v888 = vunpack.c.h.b16 %v676
    %v889 = vunpack.c.l.b16 %v677
    %v890 = vunpack.c.h.b16 %v677
    %v891 = vunpack.c.l.b16 %v678
    %v892 = vunpack.c.h.b16 %v678
    %v893 = vunpack.c.l.b16 %v679
    %v894 = vunpack.c.h.b16 %v679
    %v895 = vunpack.c.l.b16 %v680
    %v896 = vunpack.c.h.b16 %v680
    %v897 = vunpack.c.l.b16 %v681
    %v898 = vunpack.c.h.b16 %v681
    %v899 = vunpack.c.l.b16 %v682
    %v900 = vunpack.c.h.b16 %v682
    %v901 = vpack.c.b16 %v775, %v773
    %v902 = vpack.c.b16 %v776, %v774
    %v903 = vpack.c.b16 %v779, %v777
    %v904 = vpack.c.b16 %v780, %v778
    %v905 = vpack.c.b16 %v783, %v781
    %v906 = vpack.c.b16 %v784, %v782
    %v907 = vpack.c.b16 %v787, %v785
    %v908 = vpack.c.b16 %v788, %v786
    %v909 = vpack.c.b16 %v791, %v789
    %v910 = vpack.c.b16 %v792, %v790
    %v911 = vpack.c.b16 %v795, %v793
    %v912 = vpack.c.b16 %v796, %v794
    %v913 = vpack.c.b16 %v799, %v797
    %v914 = vpack.c.b16 %v800, %v798
    %v915 = vpack.c.b16 %v803, %v801
    %v916 = vpack.c.b16 %v804, %v802
    %v917 = vpack.c.b16 %v807, %v805
    %v918 = vpack.c.b16 %v808, %v806
    %v919 = vpack.c.b16 %v811, %v809
    %v920 = vpack.c.b16 %v812, %v810
    %v921 = vpack.c.b16 %v815, %v813
    %v922 = vpack.c.b16 %v816, %v814
    %v923 = vpack.c.b16 %v819, %v817
    %v924 = vpack.c.b16 %v820, %v818
    %v925 = vpack.c.b16 %v823, %v821
    %v926 = vpack.c.b16 %v824, %v822
    %v927 = vpack.c.b16 %v827, %v825
    %v928 = vpack.c.b16 %v828, %v826
    %v929 = vpack.c.b16 %v831, %v829
    %v930 = vpack.c.b16 %v832, %v830
    %v931 = vpack.c.b16 %v835, %v833
    %v932 = vpack.c.b16 %v836, %v834
    %v933 = vpack.c.b16 %v839, %v837
    %v934 = vpack.c.b16 %v840, %v838
    %v935 = vpack.c.b16 %v843, %v841
    %v936 = vpack.c.b16 %v844, %v842
    %v937 = vpack.c.b16 %v847, %v845
    %v938 = vpack.c.b16 %v848, %v846
    %v939 = vpack.c.b16 %v851, %v849
    %v940 = vpack.c.b16 %v852, %v850
    %v941 = vpack.c.b16 %v855, %v853
    %v942 = vpack.c.b16 %v856, %v854
    %v943 = vpack.c.b16 %v859, %v857
    %v944 = vpack.c.b16 %v860, %v858
    %v945 = vpack.c.b16 %v863, %v861
    %v946 = vpack.c.b16 %v864, %v862
    %v947 = vpack.c.b16 %v867, %v865
    %v948 = vpack.c.b16 %v868, %v866
    %v949 = vpack.c.b16 %v871, %v869
    %v950 = vpack.c.b16 %v872, %v870
    %v951 = vpack.c.b16 %v875, %v873
    %v952 = vpack.c.b16 %v876, %v874
    %v953 = vpack.c.b16 %v879, %v877
    %v954 = vpack.c.b16 %v880, %v878
    %v955 = vpack.c.b16 %v883, %v881
    %v956 = vpack.c.b16 %v884, %v882
    %v957 = vpack.c.b16 %v887, %v885
    %v958 = vpack.c.b16 %v888, %v886
    %v959 = vpack.c.b16 %v891, %v889
    %v960 = vpack.c.b16 %v892, %v890
    %v961 = vpack.c.b16 %v895, %v893
    %v962 = vpack.c.b16 %v896, %v894
    %v963 = vpack.c.b16 %v899, %v897
    %v964 = vpack.c.b16 %v900, %v898
    %1029 = vmatpush.bf16.msra.mxu0 %v915
    %1030 = vmatpush.bf16.msra.mxu0 %v913
    %1031 = vmatpush.bf16.msra.mxu0 %v911
    %1032 = vmatpush.bf16.msra.mxu0 %v909
    %1033 = vmatpush.bf16.msra.mxu0 %v907
    %1034 = vmatpush.bf16.msra.mxu0 %v905
    %1035 = vmatpush.bf16.msra.mxu0 %v903
    %1036 = vmatpush.bf16.msra.mxu0 %v901
    %1037 = vmatmul.bf16.gmra.mxu0 %v701
    %v1038 = vpop.f32.mrf.mxu0
    %v1039 = vadd.f32 %v685, %v1038
    %v1040 = vpop.f32.mrf.mxu0
    %v1041 = vadd.f32 %v685, %v1040
    %1042 = vdwg.mxu0
    %1043 = vmatpush.bf16.msra.mxu0 %v931
    %1044 = vmatpush.bf16.msra.mxu0 %v929
    %1045 = vmatpush.bf16.msra.mxu0 %v927
    %1046 = vmatpush.bf16.msra.mxu0 %v925
    %1047 = vmatpush.bf16.msra.mxu0 %v923
    %1048 = vmatpush.bf16.msra.mxu0 %v921
    %1049 = vmatpush.bf16.msra.mxu0 %v919
    %1050 = vmatpush.bf16.msra.mxu0 %v917
    %1051 = vmatmul.bf16.gmra.mxu0 %v702
    %v1052 = vpop.f32.mrf.mxu0
    %v1053 = vadd.f32 %v1039, %v1052
    %v1054 = vpop.f32.mrf.mxu0
    %v1055 = vadd.f32 %v1041, %v1054
    %1056 = vdwg.mxu0
    %1057 = vmatpush.bf16.msra.mxu0 %v947
    %1058 = vmatpush.bf16.msra.mxu0 %v945
    %1059 = vmatpush.bf16.msra.mxu0 %v943
    %1060 = vmatpush.bf16.msra.mxu0 %v941
    %1061 = vmatpush.bf16.msra.mxu0 %v939
    %1062 = vmatpush.bf16.msra.mxu0 %v937
    %1063 = vmatpush.bf16.msra.mxu0 %v935
    %1064 = vmatpush.bf16.msra.mxu0 %v933
    %1065 = vmatmul.bf16.gmra.mxu0 %v703
    %v1066 = vpop.f32.mrf.mxu0
    %v1067 = vadd.f32 %v1053, %v1066
    %v1068 = vpop.f32.mrf.mxu0
    %v1069 = vadd.f32 %v1055, %v1068
    %1070 = vdwg.mxu0
    %1071 = vmatpush.bf16.msra.mxu0 %v963
    %1072 = vmatpush.bf16.msra.mxu0 %v961
    %1073 = vmatpush.bf16.msra.mxu0 %v959
    %1074 = vmatpush.bf16.msra.mxu0 %v957
    %1075 = vmatpush.bf16.msra.mxu0 %v955
    %1076 = vmatpush.bf16.msra.mxu0 %v953
    %1077 = vmatpush.bf16.msra.mxu0 %v951
    %1078 = vmatpush.bf16.msra.mxu0 %v949
    %1079 = vmatmul.bf16.gmra.mxu0 %v704
    %v1080 = vpop.f32.mrf.mxu0
    %v1081 = vadd.f32 %v1067, %v1080
    %v1082 = vpop.f32.mrf.mxu0
    %v1083 = vadd.f32 %v1069, %v1082
    %1084 = vdwg.mxu0
    %1085 = vmatpush.bf16.msra.mxu0 %v916
    %1086 = vmatpush.bf16.msra.mxu0 %v914
    %1087 = vmatpush.bf16.msra.mxu0 %v912
    %1088 = vmatpush.bf16.msra.mxu0 %v910
    %1089 = vmatpush.bf16.msra.mxu0 %v908
    %1090 = vmatpush.bf16.msra.mxu0 %v906
    %1091 = vmatpush.bf16.msra.mxu0 %v904
    %1092 = vmatpush.bf16.msra.mxu0 %v902
    %1093 = vmatmul.bf16.gmra.mxu0 %v701
    %v1094 = vpop.f32.mrf.mxu0
    %v1095 = vadd.f32 %v686, %v1094
    %v1096 = vpop.f32.mrf.mxu0
    %v1097 = vadd.f32 %v686, %v1096
    %1098 = vdwg.mxu0
    %1099 = vmatpush.bf16.msra.mxu0 %v932
    %1100 = vmatpush.bf16.msra.mxu0 %v930
    %1101 = vmatpush.bf16.msra.mxu0 %v928
    %1102 = vmatpush.bf16.msra.mxu0 %v926
    %1103 = vmatpush.bf16.msra.mxu0 %v924
    %1104 = vmatpush.bf16.msra.mxu0 %v922
    %1105 = vmatpush.bf16.msra.mxu0 %v920
    %1106 = vmatpush.bf16.msra.mxu0 %v918
    %1107 = vmatmul.bf16.gmra.mxu0 %v702
    %v1108 = vpop.f32.mrf.mxu0
    %v1109 = vadd.f32 %v1095, %v1108
    %v1110 = vpop.f32.mrf.mxu0
    %v1111 = vadd.f32 %v1097, %v1110
    %1112 = vdwg.mxu0
    %1113 = vmatpush.bf16.msra.mxu0 %v948
    %1114 = vmatpush.bf16.msra.mxu0 %v946
    %1115 = vmatpush.bf16.msra.mxu0 %v944
    %1116 = vmatpush.bf16.msra.mxu0 %v942
    %1117 = vmatpush.bf16.msra.mxu0 %v940
    %1118 = vmatpush.bf16.msra.mxu0 %v938
    %1119 = vmatpush.bf16.msra.mxu0 %v936
    %1120 = vmatpush.bf16.msra.mxu0 %v934
    %1121 = vmatmul.bf16.gmra.mxu0 %v703
    %v1122 = vpop.f32.mrf.mxu0
    %v1123 = vadd.f32 %v1109, %v1122
    %v1124 = vpop.f32.mrf.mxu0
    %v1125 = vadd.f32 %v1111, %v1124
    %1126 = vdwg.mxu0
    %1127 = vmatpush.bf16.msra.mxu0 %v964
    %1128 = vmatpush.bf16.msra.mxu0 %v962
    %1129 = vmatpush.bf16.msra.mxu0 %v960
    %1130 = vmatpush.bf16.msra.mxu0 %v958
    %1131 = vmatpush.bf16.msra.mxu0 %v956
    %1132 = vmatpush.bf16.msra.mxu0 %v954
    %1133 = vmatpush.bf16.msra.mxu0 %v952
    %1134 = vmatpush.bf16.msra.mxu0 %v950
    %1135 = vmatmul.bf16.gmra.mxu0 %v704
    %v1136 = vpop.f32.mrf.mxu0
    %v1137 = vadd.f32 %v1123, %v1136
    %v1138 = vpop.f32.mrf.mxu0
    %v1139 = vadd.f32 %v1125, %v1138
    %1140 = vdwg.mxu0
    %v1141 = vtanh.pop %v1081
    %v1142 = vtanh.pop %v1137
    %v1143 = vtanh.pop %v1083
    %v1144 = vtanh.pop %v1139
    %v1145 = vpack.c.bf16 %v1143, %v1141
    %v1146 = vpack.c.bf16 %v1144, %v1142
    %v1147 = vld [vmem:[#allocation6] sm:$0xf]
    %v1148 = vld [vmem:[#allocation6 + $0x4] sm:$0xf]
    %v1149 = vld [vmem:[#allocation6 + $0x8] sm:$0xf]
    %v1150 = vld [vmem:[#allocation6 + $0xc] sm:$0xf]
    %v1151 = vld [vmem:[#allocation6 + $0x10] sm:$0xf]
    %v1152 = vld [vmem:[#allocation6 + $0x14] sm:$0xf]
    %v1153 = vld [vmem:[#allocation6 + $0x18] sm:$0xf]
    %v1154 = vld [vmem:[#allocation6 + $0x1c] sm:$0xf]
    %v1155 = vld [vmem:[#allocation6 + $0x20] sm:$0xf]
    %v1156 = vld [vmem:[#allocation6 + $0x24] sm:$0xf]
    %v1157 = vld [vmem:[#allocation6 + $0x28] sm:$0xf]
    %v1158 = vld [vmem:[#allocation6 + $0x2c] sm:$0xf]
    %v1159 = vld [vmem:[#allocation6 + $0x30] sm:$0xf]
    %v1160 = vld [vmem:[#allocation6 + $0x34] sm:$0xf]
    %v1161 = vld [vmem:[#allocation6 + $0x38] sm:$0xf]
    %v1162 = vld [vmem:[#allocation6 + $0x3c] sm:$0xf]
    %v1163 = vld [vmem:[#allocation6 + $0x40] sm:$0xf]
    %v1164 = vld [vmem:[#allocation6 + $0x44] sm:$0xf]
    %v1165 = vld [vmem:[#allocation6 + $0x48] sm:$0xf]
    %v1166 = vld [vmem:[#allocation6 + $0x4c] sm:$0xf]
    %v1167 = vld [vmem:[#allocation6 + $0x50] sm:$0xf]
    %v1168 = vld [vmem:[#allocation6 + $0x54] sm:$0xf]
    %v1169 = vld [vmem:[#allocation6 + $0x58] sm:$0xf]
    %v1170 = vld [vmem:[#allocation6 + $0x5c] sm:$0xf]
    %v1171 = vld [vmem:[#allocation6 + $0x60] sm:$0xf]
    %v1172 = vld [vmem:[#allocation6 + $0x64] sm:$0xf]
    %v1173 = vld [vmem:[#allocation6 + $0x68] sm:$0xf]
    %v1174 = vld [vmem:[#allocation6 + $0x6c] sm:$0xf]
    %v1175 = vld [vmem:[#allocation6 + $0x70] sm:$0xf]
    %v1176 = vld [vmem:[#allocation6 + $0x74] sm:$0xf]
    %v1177 = vld [vmem:[#allocation6 + $0x78] sm:$0xf]
    %v1178 = vld [vmem:[#allocation6 + $0x7c] sm:$0xf]
    %v1179 = vld [vmem:[%s6] sm:$0x1]
    %v1181 = vperm.slane %v1179, 0
    %v1215 = vunpack.c.l.b16 %v1147
    %v1216 = vunpack.c.l.b16 %v1148
    %v1217 = vunpack.c.l.b16 %v1149
    %v1218 = vunpack.c.l.b16 %v1150
    %v1219 = vunpack.c.l.b16 %v1151
    %v1220 = vunpack.c.l.b16 %v1152
    %v1221 = vunpack.c.l.b16 %v1153
    %v1222 = vunpack.c.l.b16 %v1154
    %v1223 = vunpack.c.l.b16 %v1155
    %v1224 = vunpack.c.l.b16 %v1156
    %v1225 = vunpack.c.l.b16 %v1157
    %v1226 = vunpack.c.l.b16 %v1158
    %v1227 = vunpack.c.l.b16 %v1159
    %v1228 = vunpack.c.l.b16 %v1160
    %v1229 = vunpack.c.l.b16 %v1161
    %v1230 = vunpack.c.l.b16 %v1162
    %v1231 = vunpack.c.l.b16 %v1163
    %v1232 = vunpack.c.l.b16 %v1164
    %v1233 = vunpack.c.l.b16 %v1165
    %v1234 = vunpack.c.l.b16 %v1166
    %v1235 = vunpack.c.l.b16 %v1167
    %v1236 = vunpack.c.l.b16 %v1168
    %v1237 = vunpack.c.l.b16 %v1169
    %v1238 = vunpack.c.l.b16 %v1170
    %v1239 = vunpack.c.l.b16 %v1171
    %v1240 = vunpack.c.l.b16 %v1172
    %v1241 = vunpack.c.l.b16 %v1173
    %v1242 = vunpack.c.l.b16 %v1174
    %v1243 = vunpack.c.l.b16 %v1175
    %v1244 = vunpack.c.l.b16 %v1176
    %v1245 = vunpack.c.l.b16 %v1177
    %v1246 = vunpack.c.l.b16 %v1178
    %v1247 = vpack.c.b16 %v1216, %v1215
    %v1248 = vpack.c.b16 %v1218, %v1217
    %v1249 = vpack.c.b16 %v1220, %v1219
    %v1250 = vpack.c.b16 %v1222, %v1221
    %v1251 = vpack.c.b16 %v1224, %v1223
    %v1252 = vpack.c.b16 %v1226, %v1225
    %v1253 = vpack.c.b16 %v1228, %v1227
    %v1254 = vpack.c.b16 %v1230, %v1229
    %v1255 = vpack.c.b16 %v1232, %v1231
    %v1256 = vpack.c.b16 %v1234, %v1233
    %v1257 = vpack.c.b16 %v1236, %v1235
    %v1258 = vpack.c.b16 %v1238, %v1237
    %v1259 = vpack.c.b16 %v1240, %v1239
    %v1260 = vpack.c.b16 %v1242, %v1241
    %v1261 = vpack.c.b16 %v1244, %v1243
    %v1262 = vpack.c.b16 %v1246, %v1245
    %1279 = vmatpush.bf16.msra.mxu0 %v1254
    %1280 = vmatpush.bf16.msra.mxu0 %v1253
    %1281 = vmatpush.bf16.msra.mxu0 %v1252
    %1282 = vmatpush.bf16.msra.mxu0 %v1251
    %1283 = vmatpush.bf16.msra.mxu0 %v1250
    %1284 = vmatpush.bf16.msra.mxu0 %v1249
    %1285 = vmatpush.bf16.msra.mxu0 %v1248
    %1286 = vmatpush.bf16.msra.mxu0 %v1247
    %1287 = vmatmul.bf16.gmra.mxu0 %v1145
    %v1288 = vpop.f32.mrf.mxu0
    %v1289 = vadd.f32 %v1181, %v1288
    %v1290 = vpop.f32.mrf.mxu0
    %v1291 = vadd.f32 %v1181, %v1290
    %1292 = vdwg.mxu0
    %1293 = vmatpush.bf16.msra.mxu0 %v1262
    %1294 = vmatpush.bf16.msra.mxu0 %v1261
    %1295 = vmatpush.bf16.msra.mxu0 %v1260
    %1296 = vmatpush.bf16.msra.mxu0 %v1259
    %1297 = vmatpush.bf16.msra.mxu0 %v1258
    %1298 = vmatpush.bf16.msra.mxu0 %v1257
    %1299 = vmatpush.bf16.msra.mxu0 %v1256
    %1300 = vmatpush.bf16.msra.mxu0 %v1255
    %1301 = vmatmul.bf16.gmra.mxu0 %v1146
    %v1302 = vpop.f32.mrf.mxu0
    %v1303 = vadd.f32 %v1289, %v1302
    %v1304 = vpop.f32.mrf.mxu0
    %v1305 = vadd.f32 %v1291, %v1304
    %1306 = vdwg.mxu0
    %v1307 = vtanh.pop %v1303
    %v1308 = vtanh.pop %v1305
    %1309 = vst [vmem:[%s7] sm:$0xff] %v1307
    %1310 = vst [vmem:[%s7 + $0x10] sm:$0xff] %v1308
    %s1311 = scalar_lea.vmem [#allocation4], 512
    %v1312 = vld [vmem:[%s1311] sm:$0xff]
    %v1313 = vld [vmem:[%s1311 + $0x8] sm:$0xff]
    %v1314 = vld [vmem:[%s1311 + $0x10] sm:$0xff]
    %v1315 = vld [vmem:[%s1311 + $0x18] sm:$0xff]
    %v1316 = vld [vmem:[%s1311 + $0x20] sm:$0xff]
    %v1317 = vld [vmem:[%s1311 + $0x28] sm:$0xff]
    %v1318 = vld [vmem:[%s1311 + $0x30] sm:$0xff]
    %v1319 = vld [vmem:[%s1311 + $0x38] sm:$0xff]
    %v1320 = vld [vmem:[%s1311 + $0x40] sm:$0xff]
    %v1321 = vld [vmem:[%s1311 + $0x48] sm:$0xff]
    %v1322 = vld [vmem:[%s1311 + $0x50] sm:$0xff]
    %v1323 = vld [vmem:[%s1311 + $0x58] sm:$0xff]
    %v1324 = vld [vmem:[%s1311 + $0x60] sm:$0xff]
    %v1325 = vld [vmem:[%s1311 + $0x68] sm:$0xff]
    %v1326 = vld [vmem:[%s1311 + $0x70] sm:$0xff]
    %v1327 = vld [vmem:[%s1311 + $0x78] sm:$0xff]
    %v1328 = vld [vmem:[%s1311 + $0x80] sm:$0xff]
    %v1329 = vld [vmem:[%s1311 + $0x88] sm:$0xff]
    %v1330 = vld [vmem:[%s1311 + $0x90] sm:$0xff]
    %v1331 = vld [vmem:[%s1311 + $0x98] sm:$0xff]
    %v1332 = vld [vmem:[%s1311 + $0xa0] sm:$0xff]
    %v1333 = vld [vmem:[%s1311 + $0xa8] sm:$0xff]
    %v1334 = vld [vmem:[%s1311 + $0xb0] sm:$0xff]
    %v1335 = vld [vmem:[%s1311 + $0xb8] sm:$0xff]
    %v1336 = vld [vmem:[%s1311 + $0xc0] sm:$0xff]
    %v1337 = vld [vmem:[%s1311 + $0xc8] sm:$0xff]
    %v1338 = vld [vmem:[%s1311 + $0xd0] sm:$0xff]
    %v1339 = vld [vmem:[%s1311 + $0xd8] sm:$0xff]
    %v1340 = vld [vmem:[%s1311 + $0xe0] sm:$0xff]
    %v1341 = vld [vmem:[%s1311 + $0xe8] sm:$0xff]
    %v1342 = vld [vmem:[%s1311 + $0xf0] sm:$0xff]
    %v1343 = vld [vmem:[%s1311 + $0xf8] sm:$0xff]
    %v1344 = vld [vmem:[%s1311 + $0x100] sm:$0xff]
    %v1345 = vld [vmem:[%s1311 + $0x108] sm:$0xff]
    %v1346 = vld [vmem:[%s1311 + $0x110] sm:$0xff]
    %v1347 = vld [vmem:[%s1311 + $0x118] sm:$0xff]
    %v1348 = vld [vmem:[%s1311 + $0x120] sm:$0xff]
    %v1349 = vld [vmem:[%s1311 + $0x128] sm:$0xff]
    %v1350 = vld [vmem:[%s1311 + $0x130] sm:$0xff]
    %v1351 = vld [vmem:[%s1311 + $0x138] sm:$0xff]
    %v1352 = vld [vmem:[%s1311 + $0x140] sm:$0xff]
    %v1353 = vld [vmem:[%s1311 + $0x148] sm:$0xff]
    %v1354 = vld [vmem:[%s1311 + $0x150] sm:$0xff]
    %v1355 = vld [vmem:[%s1311 + $0x158] sm:$0xff]
    %v1356 = vld [vmem:[%s1311 + $0x160] sm:$0xff]
    %v1357 = vld [vmem:[%s1311 + $0x168] sm:$0xff]
    %v1358 = vld [vmem:[%s1311 + $0x170] sm:$0xff]
    %v1359 = vld [vmem:[%s1311 + $0x178] sm:$0xff]
    %v1360 = vld [vmem:[%s1311 + $0x180] sm:$0xff]
    %v1361 = vld [vmem:[%s1311 + $0x188] sm:$0xff]
    %v1362 = vld [vmem:[%s1311 + $0x190] sm:$0xff]
    %v1363 = vld [vmem:[%s1311 + $0x198] sm:$0xff]
    %v1364 = vld [vmem:[%s1311 + $0x1a0] sm:$0xff]
    %v1365 = vld [vmem:[%s1311 + $0x1a8] sm:$0xff]
    %v1366 = vld [vmem:[%s1311 + $0x1b0] sm:$0xff]
    %v1367 = vld [vmem:[%s1311 + $0x1b8] sm:$0xff]
    %v1368 = vld [vmem:[%s1311 + $0x1c0] sm:$0xff]
    %v1369 = vld [vmem:[%s1311 + $0x1c8] sm:$0xff]
    %v1370 = vld [vmem:[%s1311 + $0x1d0] sm:$0xff]
    %v1371 = vld [vmem:[%s1311 + $0x1d8] sm:$0xff]
    %v1372 = vld [vmem:[%s1311 + $0x1e0] sm:$0xff]
    %v1373 = vld [vmem:[%s1311 + $0x1e8] sm:$0xff]
    %v1374 = vld [vmem:[%s1311 + $0x1f0] sm:$0xff]
    %v1375 = vld [vmem:[%s1311 + $0x1f8] sm:$0xff]
    %s1376 = scalar_lea.vmem %s4, 2
    %v1377 = vld [vmem:[%s1376] sm:$0x3]
    %v1379 = vperm.slane %v1377, 0
    %v1380 = vperm.slane %v1377, 1
    %v1387 = vunpack.c.l.b16 %v613
    %v1388 = vunpack.c.h.b16 %v613
    %v1389 = vunpack.c.l.b16 %v614
    %v1390 = vunpack.c.h.b16 %v614
    %v1391 = vunpack.c.l.b16 %v617
    %v1392 = vunpack.c.h.b16 %v617
    %v1393 = vunpack.c.l.b16 %v618
    %v1394 = vunpack.c.h.b16 %v618
    %v1395 = vpack.c.b16 %v1391, %v1387
    %v1396 = vpack.c.b16 %v1392, %v1388
    %v1397 = vpack.c.b16 %v1393, %v1389
    %v1398 = vpack.c.b16 %v1394, %v1390
    %v1467 = vunpack.c.l.b16 %v1312
    %v1468 = vunpack.c.h.b16 %v1312
    %v1469 = vunpack.c.l.b16 %v1313
    %v1470 = vunpack.c.h.b16 %v1313
    %v1471 = vunpack.c.l.b16 %v1314
    %v1472 = vunpack.c.h.b16 %v1314
    %v1473 = vunpack.c.l.b16 %v1315
    %v1474 = vunpack.c.h.b16 %v1315
    %v1475 = vunpack.c.l.b16 %v1316
    %v1476 = vunpack.c.h.b16 %v1316
    %v1477 = vunpack.c.l.b16 %v1317
    %v1478 = vunpack.c.h.b16 %v1317
    %v1479 = vunpack.c.l.b16 %v1318
    %v1480 = vunpack.c.h.b16 %v1318
    %v1481 = vunpack.c.l.b16 %v1319
    %v1482 = vunpack.c.h.b16 %v1319
    %v1483 = vunpack.c.l.b16 %v1320
    %v1484 = vunpack.c.h.b16 %v1320
    %v1485 = vunpack.c.l.b16 %v1321
    %v1486 = vunpack.c.h.b16 %v1321
    %v1487 = vunpack.c.l.b16 %v1322
    %v1488 = vunpack.c.h.b16 %v1322
    %v1489 = vunpack.c.l.b16 %v1323
    %v1490 = vunpack.c.h.b16 %v1323
    %v1491 = vunpack.c.l.b16 %v1324
    %v1492 = vunpack.c.h.b16 %v1324
    %v1493 = vunpack.c.l.b16 %v1325
    %v1494 = vunpack.c.h.b16 %v1325
    %v1495 = vunpack.c.l.b16 %v1326
    %v1496 = vunpack.c.h.b16 %v1326
    %v1497 = vunpack.c.l.b16 %v1327
    %v1498 = vunpack.c.h.b16 %v1327
    %v1499 = vunpack.c.l.b16 %v1328
    %v1500 = vunpack.c.h.b16 %v1328
    %v1501 = vunpack.c.l.b16 %v1329
    %v1502 = vunpack.c.h.b16 %v1329
    %v1503 = vunpack.c.l.b16 %v1330
    %v1504 = vunpack.c.h.b16 %v1330
    %v1505 = vunpack.c.l.b16 %v1331
    %v1506 = vunpack.c.h.b16 %v1331
    %v1507 = vunpack.c.l.b16 %v1332
    %v1508 = vunpack.c.h.b16 %v1332
    %v1509 = vunpack.c.l.b16 %v1333
    %v1510 = vunpack.c.h.b16 %v1333
    %v1511 = vunpack.c.l.b16 %v1334
    %v1512 = vunpack.c.h.b16 %v1334
    %v1513 = vunpack.c.l.b16 %v1335
    %v1514 = vunpack.c.h.b16 %v1335
    %v1515 = vunpack.c.l.b16 %v1336
    %v1516 = vunpack.c.h.b16 %v1336
    %v1517 = vunpack.c.l.b16 %v1337
    %v1518 = vunpack.c.h.b16 %v1337
    %v1519 = vunpack.c.l.b16 %v1338
    %v1520 = vunpack.c.h.b16 %v1338
    %v1521 = vunpack.c.l.b16 %v1339
    %v1522 = vunpack.c.h.b16 %v1339
    %v1523 = vunpack.c.l.b16 %v1340
    %v1524 = vunpack.c.h.b16 %v1340
    %v1525 = vunpack.c.l.b16 %v1341
    %v1526 = vunpack.c.h.b16 %v1341
    %v1527 = vunpack.c.l.b16 %v1342
    %v1528 = vunpack.c.h.b16 %v1342
    %v1529 = vunpack.c.l.b16 %v1343
    %v1530 = vunpack.c.h.b16 %v1343
    %v1531 = vunpack.c.l.b16 %v1344
    %v1532 = vunpack.c.h.b16 %v1344
    %v1533 = vunpack.c.l.b16 %v1345
    %v1534 = vunpack.c.h.b16 %v1345
    %v1535 = vunpack.c.l.b16 %v1346
    %v1536 = vunpack.c.h.b16 %v1346
    %v1537 = vunpack.c.l.b16 %v1347
    %v1538 = vunpack.c.h.b16 %v1347
    %v1539 = vunpack.c.l.b16 %v1348
    %v1540 = vunpack.c.h.b16 %v1348
    %v1541 = vunpack.c.l.b16 %v1349
    %v1542 = vunpack.c.h.b16 %v1349
    %v1543 = vunpack.c.l.b16 %v1350
    %v1544 = vunpack.c.h.b16 %v1350
    %v1545 = vunpack.c.l.b16 %v1351
    %v1546 = vunpack.c.h.b16 %v1351
    %v1547 = vunpack.c.l.b16 %v1352
    %v1548 = vunpack.c.h.b16 %v1352
    %v1549 = vunpack.c.l.b16 %v1353
    %v1550 = vunpack.c.h.b16 %v1353
    %v1551 = vunpack.c.l.b16 %v1354
    %v1552 = vunpack.c.h.b16 %v1354
    %v1553 = vunpack.c.l.b16 %v1355
    %v1554 = vunpack.c.h.b16 %v1355
    %v1555 = vunpack.c.l.b16 %v1356
    %v1556 = vunpack.c.h.b16 %v1356
    %v1557 = vunpack.c.l.b16 %v1357
    %v1558 = vunpack.c.h.b16 %v1357
    %v1559 = vunpack.c.l.b16 %v1358
    %v1560 = vunpack.c.h.b16 %v1358
    %v1561 = vunpack.c.l.b16 %v1359
    %v1562 = vunpack.c.h.b16 %v1359
    %v1563 = vunpack.c.l.b16 %v1360
    %v1564 = vunpack.c.h.b16 %v1360
    %v1565 = vunpack.c.l.b16 %v1361
    %v1566 = vunpack.c.h.b16 %v1361
    %v1567 = vunpack.c.l.b16 %v1362
    %v1568 = vunpack.c.h.b16 %v1362
    %v1569 = vunpack.c.l.b16 %v1363
    %v1570 = vunpack.c.h.b16 %v1363
    %v1571 = vunpack.c.l.b16 %v1364
    %v1572 = vunpack.c.h.b16 %v1364
    %v1573 = vunpack.c.l.b16 %v1365
    %v1574 = vunpack.c.h.b16 %v1365
    %v1575 = vunpack.c.l.b16 %v1366
    %v1576 = vunpack.c.h.b16 %v1366
    %v1577 = vunpack.c.l.b16 %v1367
    %v1578 = vunpack.c.h.b16 %v1367
    %v1579 = vunpack.c.l.b16 %v1368
    %v1580 = vunpack.c.h.b16 %v1368
    %v1581 = vunpack.c.l.b16 %v1369
    %v1582 = vunpack.c.h.b16 %v1369
    %v1583 = vunpack.c.l.b16 %v1370
    %v1584 = vunpack.c.h.b16 %v1370
    %v1585 = vunpack.c.l.b16 %v1371
    %v1586 = vunpack.c.h.b16 %v1371
    %v1587 = vunpack.c.l.b16 %v1372
    %v1588 = vunpack.c.h.b16 %v1372
    %v1589 = vunpack.c.l.b16 %v1373
    %v1590 = vunpack.c.h.b16 %v1373
    %v1591 = vunpack.c.l.b16 %v1374
    %v1592 = vunpack.c.h.b16 %v1374
    %v1593 = vunpack.c.l.b16 %v1375
    %v1594 = vunpack.c.h.b16 %v1375
    %v1595 = vpack.c.b16 %v1469, %v1467
    %v1596 = vpack.c.b16 %v1470, %v1468
    %v1597 = vpack.c.b16 %v1473, %v1471
    %v1598 = vpack.c.b16 %v1474, %v1472
    %v1599 = vpack.c.b16 %v1477, %v1475
    %v1600 = vpack.c.b16 %v1478, %v1476
    %v1601 = vpack.c.b16 %v1481, %v1479
    %v1602 = vpack.c.b16 %v1482, %v1480
    %v1603 = vpack.c.b16 %v1485, %v1483
    %v1604 = vpack.c.b16 %v1486, %v1484
    %v1605 = vpack.c.b16 %v1489, %v1487
    %v1606 = vpack.c.b16 %v1490, %v1488
    %v1607 = vpack.c.b16 %v1493, %v1491
    %v1608 = vpack.c.b16 %v1494, %v1492
    %v1609 = vpack.c.b16 %v1497, %v1495
    %v1610 = vpack.c.b16 %v1498, %v1496
    %v1611 = vpack.c.b16 %v1501, %v1499
    %v1612 = vpack.c.b16 %v1502, %v1500
    %v1613 = vpack.c.b16 %v1505, %v1503
    %v1614 = vpack.c.b16 %v1506, %v1504
    %v1615 = vpack.c.b16 %v1509, %v1507
    %v1616 = vpack.c.b16 %v1510, %v1508
    %v1617 = vpack.c.b16 %v1513, %v1511
    %v1618 = vpack.c.b16 %v1514, %v1512
    %v1619 = vpack.c.b16 %v1517, %v1515
    %v1620 = vpack.c.b16 %v1518, %v1516
    %v1621 = vpack.c.b16 %v1521, %v1519
    %v1622 = vpack.c.b16 %v1522, %v1520
    %v1623 = vpack.c.b16 %v1525, %v1523
    %v1624 = vpack.c.b16 %v1526, %v1524
    %v1625 = vpack.c.b16 %v1529, %v1527
    %v1626 = vpack.c.b16 %v1530, %v1528
    %v1627 = vpack.c.b16 %v1533, %v1531
    %v1628 = vpack.c.b16 %v1534, %v1532
    %v1629 = vpack.c.b16 %v1537, %v1535
    %v1630 = vpack.c.b16 %v1538, %v1536
    %v1631 = vpack.c.b16 %v1541, %v1539
    %v1632 = vpack.c.b16 %v1542, %v1540
    %v1633 = vpack.c.b16 %v1545, %v1543
    %v1634 = vpack.c.b16 %v1546, %v1544
    %v1635 = vpack.c.b16 %v1549, %v1547
    %v1636 = vpack.c.b16 %v1550, %v1548
    %v1637 = vpack.c.b16 %v1553, %v1551
    %v1638 = vpack.c.b16 %v1554, %v1552
    %v1639 = vpack.c.b16 %v1557, %v1555
    %v1640 = vpack.c.b16 %v1558, %v1556
    %v1641 = vpack.c.b16 %v1561, %v1559
    %v1642 = vpack.c.b16 %v1562, %v1560
    %v1643 = vpack.c.b16 %v1565, %v1563
    %v1644 = vpack.c.b16 %v1566, %v1564
    %v1645 = vpack.c.b16 %v1569, %v1567
    %v1646 = vpack.c.b16 %v1570, %v1568
    %v1647 = vpack.c.b16 %v1573, %v1571
    %v1648 = vpack.c.b16 %v1574, %v1572
    %v1649 = vpack.c.b16 %v1577, %v1575
    %v1650 = vpack.c.b16 %v1578, %v1576
    %v1651 = vpack.c.b16 %v1581, %v1579
    %v1652 = vpack.c.b16 %v1582, %v1580
    %v1653 = vpack.c.b16 %v1585, %v1583
    %v1654 = vpack.c.b16 %v1586, %v1584
    %v1655 = vpack.c.b16 %v1589, %v1587
    %v1656 = vpack.c.b16 %v1590, %v1588
    %v1657 = vpack.c.b16 %v1593, %v1591
    %v1658 = vpack.c.b16 %v1594, %v1592
    %1723 = vmatpush.bf16.msra.mxu0 %v1609
    %1724 = vmatpush.bf16.msra.mxu0 %v1607
    %1725 = vmatpush.bf16.msra.mxu0 %v1605
    %1726 = vmatpush.bf16.msra.mxu0 %v1603
    %1727 = vmatpush.bf16.msra.mxu0 %v1601
    %1728 = vmatpush.bf16.msra.mxu0 %v1599
    %1729 = vmatpush.bf16.msra.mxu0 %v1597
    %1730 = vmatpush.bf16.msra.mxu0 %v1595
    %1731 = vmatmul.bf16.gmra.mxu0 %v1395
    %v1732 = vpop.f32.mrf.mxu0
    %v1733 = vadd.f32 %v1379, %v1732
    %v1734 = vpop.f32.mrf.mxu0
    %v1735 = vadd.f32 %v1379, %v1734
    %1736 = vdwg.mxu0
    %1737 = vmatpush.bf16.msra.mxu0 %v1625
    %1738 = vmatpush.bf16.msra.mxu0 %v1623
    %1739 = vmatpush.bf16.msra.mxu0 %v1621
    %1740 = vmatpush.bf16.msra.mxu0 %v1619
    %1741 = vmatpush.bf16.msra.mxu0 %v1617
    %1742 = vmatpush.bf16.msra.mxu0 %v1615
    %1743 = vmatpush.bf16.msra.mxu0 %v1613
    %1744 = vmatpush.bf16.msra.mxu0 %v1611
    %1745 = vmatmul.bf16.gmra.mxu0 %v1396
    %v1746 = vpop.f32.mrf.mxu0
    %v1747 = vadd.f32 %v1733, %v1746
    %v1748 = vpop.f32.mrf.mxu0
    %v1749 = vadd.f32 %v1735, %v1748
    %1750 = vdwg.mxu0
    %1751 = vmatpush.bf16.msra.mxu0 %v1641
    %1752 = vmatpush.bf16.msra.mxu0 %v1639
    %1753 = vmatpush.bf16.msra.mxu0 %v1637
    %1754 = vmatpush.bf16.msra.mxu0 %v1635
    %1755 = vmatpush.bf16.msra.mxu0 %v1633
    %1756 = vmatpush.bf16.msra.mxu0 %v1631
    %1757 = vmatpush.bf16.msra.mxu0 %v1629
    %1758 = vmatpush.bf16.msra.mxu0 %v1627
    %1759 = vmatmul.bf16.gmra.mxu0 %v1397
    %v1760 = vpop.f32.mrf.mxu0
    %v1761 = vadd.f32 %v1747, %v1760
    %v1762 = vpop.f32.mrf.mxu0
    %v1763 = vadd.f32 %v1749, %v1762
    %1764 = vdwg.mxu0
    %1765 = vmatpush.bf16.msra.mxu0 %v1657
    %1766 = vmatpush.bf16.msra.mxu0 %v1655
    %1767 = vmatpush.bf16.msra.mxu0 %v1653
    %1768 = vmatpush.bf16.msra.mxu0 %v1651
    %1769 = vmatpush.bf16.msra.mxu0 %v1649
    %1770 = vmatpush.bf16.msra.mxu0 %v1647
    %1771 = vmatpush.bf16.msra.mxu0 %v1645
    %1772 = vmatpush.bf16.msra.mxu0 %v1643
    %1773 = vmatmul.bf16.gmra.mxu0 %v1398
    %v1774 = vpop.f32.mrf.mxu0
    %v1775 = vadd.f32 %v1761, %v1774
    %v1776 = vpop.f32.mrf.mxu0
    %v1777 = vadd.f32 %v1763, %v1776
    %1778 = vdwg.mxu0
    %1779 = vmatpush.bf16.msra.mxu0 %v1610
    %1780 = vmatpush.bf16.msra.mxu0 %v1608
    %1781 = vmatpush.bf16.msra.mxu0 %v1606
    %1782 = vmatpush.bf16.msra.mxu0 %v1604
    %1783 = vmatpush.bf16.msra.mxu0 %v1602
    %1784 = vmatpush.bf16.msra.mxu0 %v1600
    %1785 = vmatpush.bf16.msra.mxu0 %v1598
    %1786 = vmatpush.bf16.msra.mxu0 %v1596
    %1787 = vmatmul.bf16.gmra.mxu0 %v1395
    %v1788 = vpop.f32.mrf.mxu0
    %v1789 = vadd.f32 %v1380, %v1788
    %v1790 = vpop.f32.mrf.mxu0
    %v1791 = vadd.f32 %v1380, %v1790
    %1792 = vdwg.mxu0
    %1793 = vmatpush.bf16.msra.mxu0 %v1626
    %1794 = vmatpush.bf16.msra.mxu0 %v1624
    %1795 = vmatpush.bf16.msra.mxu0 %v1622
    %1796 = vmatpush.bf16.msra.mxu0 %v1620
    %1797 = vmatpush.bf16.msra.mxu0 %v1618
    %1798 = vmatpush.bf16.msra.mxu0 %v1616
    %1799 = vmatpush.bf16.msra.mxu0 %v1614
    %1800 = vmatpush.bf16.msra.mxu0 %v1612
    %1801 = vmatmul.bf16.gmra.mxu0 %v1396
    %v1802 = vpop.f32.mrf.mxu0
    %v1803 = vadd.f32 %v1789, %v1802
    %v1804 = vpop.f32.mrf.mxu0
    %v1805 = vadd.f32 %v1791, %v1804
    %1806 = vdwg.mxu0
    %1807 = vmatpush.bf16.msra.mxu0 %v1642
    %1808 = vmatpush.bf16.msra.mxu0 %v1640
    %1809 = vmatpush.bf16.msra.mxu0 %v1638
    %1810 = vmatpush.bf16.msra.mxu0 %v1636
    %1811 = vmatpush.bf16.msra.mxu0 %v1634
    %1812 = vmatpush.bf16.msra.mxu0 %v1632
    %1813 = vmatpush.bf16.msra.mxu0 %v1630
    %1814 = vmatpush.bf16.msra.mxu0 %v1628
    %1815 = vmatmul.bf16.gmra.mxu0 %v1397
    %v1816 = vpop.f32.mrf.mxu0
    %v1817 = vadd.f32 %v1803, %v1816
    %v1818 = vpop.f32.mrf.mxu0
    %v1819 = vadd.f32 %v1805, %v1818
    %1820 = vdwg.mxu0
    %1821 = vmatpush.bf16.msra.mxu0 %v1658
    %1822 = vmatpush.bf16.msra.mxu0 %v1656
    %1823 = vmatpush.bf16.msra.mxu0 %v1654
    %1824 = vmatpush.bf16.msra.mxu0 %v1652
    %1825 = vmatpush.bf16.msra.mxu0 %v1650
    %1826 = vmatpush.bf16.msra.mxu0 %v1648
    %1827 = vmatpush.bf16.msra.mxu0 %v1646
    %1828 = vmatpush.bf16.msra.mxu0 %v1644
    %1829 = vmatmul.bf16.gmra.mxu0 %v1398
    %v1830 = vpop.f32.mrf.mxu0
    %v1831 = vadd.f32 %v1817, %v1830
    %v1832 = vpop.f32.mrf.mxu0
    %v1833 = vadd.f32 %v1819, %v1832
    %1834 = vdwg.mxu0
    %v1835 = vtanh.pop %v1775
    %v1836 = vtanh.pop %v1831
    %v1837 = vtanh.pop %v1777
    %v1838 = vtanh.pop %v1833
    %v1839 = vpack.c.bf16 %v1837, %v1835
    %v1840 = vpack.c.bf16 %v1838, %v1836
    %s1841 = scalar_lea.vmem [#allocation6], 128
    %v1842 = vld [vmem:[%s1841] sm:$0xf]
    %v1843 = vld [vmem:[%s1841 + $0x4] sm:$0xf]
    %v1844 = vld [vmem:[%s1841 + $0x8] sm:$0xf]
    %v1845 = vld [vmem:[%s1841 + $0xc] sm:$0xf]
    %v1846 = vld [vmem:[%s1841 + $0x10] sm:$0xf]
    %v1847 = vld [vmem:[%s1841 + $0x14] sm:$0xf]
    %v1848 = vld [vmem:[%s1841 + $0x18] sm:$0xf]
    %v1849 = vld [vmem:[%s1841 + $0x1c] sm:$0xf]
    %v1850 = vld [vmem:[%s1841 + $0x20] sm:$0xf]
    %v1851 = vld [vmem:[%s1841 + $0x24] sm:$0xf]
    %v1852 = vld [vmem:[%s1841 + $0x28] sm:$0xf]
    %v1853 = vld [vmem:[%s1841 + $0x2c] sm:$0xf]
    %v1854 = vld [vmem:[%s1841 + $0x30] sm:$0xf]
    %v1855 = vld [vmem:[%s1841 + $0x34] sm:$0xf]
    %v1856 = vld [vmem:[%s1841 + $0x38] sm:$0xf]
    %v1857 = vld [vmem:[%s1841 + $0x3c] sm:$0xf]
    %v1858 = vld [vmem:[%s1841 + $0x40] sm:$0xf]
    %v1859 = vld [vmem:[%s1841 + $0x44] sm:$0xf]
    %v1860 = vld [vmem:[%s1841 + $0x48] sm:$0xf]
    %v1861 = vld [vmem:[%s1841 + $0x4c] sm:$0xf]
    %v1862 = vld [vmem:[%s1841 + $0x50] sm:$0xf]
    %v1863 = vld [vmem:[%s1841 + $0x54] sm:$0xf]
    %v1864 = vld [vmem:[%s1841 + $0x58] sm:$0xf]
    %v1865 = vld [vmem:[%s1841 + $0x5c] sm:$0xf]
    %v1866 = vld [vmem:[%s1841 + $0x60] sm:$0xf]
    %v1867 = vld [vmem:[%s1841 + $0x64] sm:$0xf]
    %v1868 = vld [vmem:[%s1841 + $0x68] sm:$0xf]
    %v1869 = vld [vmem:[%s1841 + $0x6c] sm:$0xf]
    %v1870 = vld [vmem:[%s1841 + $0x70] sm:$0xf]
    %v1871 = vld [vmem:[%s1841 + $0x74] sm:$0xf]
    %v1872 = vld [vmem:[%s1841 + $0x78] sm:$0xf]
    %v1873 = vld [vmem:[%s1841 + $0x7c] sm:$0xf]
    %s1874 = scalar_lea.vmem %s6, 1
    %v1875 = vld [vmem:[%s1874] sm:$0x1]
    %v1877 = vperm.slane %v1875, 0
    %v1911 = vunpack.c.l.b16 %v1842
    %v1912 = vunpack.c.l.b16 %v1843
    %v1913 = vunpack.c.l.b16 %v1844
    %v1914 = vunpack.c.l.b16 %v1845
    %v1915 = vunpack.c.l.b16 %v1846
    %v1916 = vunpack.c.l.b16 %v1847
    %v1917 = vunpack.c.l.b16 %v1848
    %v1918 = vunpack.c.l.b16 %v1849
    %v1919 = vunpack.c.l.b16 %v1850
    %v1920 = vunpack.c.l.b16 %v1851
    %v1921 = vunpack.c.l.b16 %v1852
    %v1922 = vunpack.c.l.b16 %v1853
    %v1923 = vunpack.c.l.b16 %v1854
    %v1924 = vunpack.c.l.b16 %v1855
    %v1925 = vunpack.c.l.b16 %v1856
    %v1926 = vunpack.c.l.b16 %v1857
    %v1927 = vunpack.c.l.b16 %v1858
    %v1928 = vunpack.c.l.b16 %v1859
    %v1929 = vunpack.c.l.b16 %v1860
    %v1930 = vunpack.c.l.b16 %v1861
    %v1931 = vunpack.c.l.b16 %v1862
    %v1932 = vunpack.c.l.b16 %v1863
    %v1933 = vunpack.c.l.b16 %v1864
    %v1934 = vunpack.c.l.b16 %v1865
    %v1935 = vunpack.c.l.b16 %v1866
    %v1936 = vunpack.c.l.b16 %v1867
    %v1937 = vunpack.c.l.b16 %v1868
    %v1938 = vunpack.c.l.b16 %v1869
    %v1939 = vunpack.c.l.b16 %v1870
    %v1940 = vunpack.c.l.b16 %v1871
    %v1941 = vunpack.c.l.b16 %v1872
    %v1942 = vunpack.c.l.b16 %v1873
    %v1943 = vpack.c.b16 %v1912, %v1911
    %v1944 = vpack.c.b16 %v1914, %v1913
    %v1945 = vpack.c.b16 %v1916, %v1915
    %v1946 = vpack.c.b16 %v1918, %v1917
    %v1947 = vpack.c.b16 %v1920, %v1919
    %v1948 = vpack.c.b16 %v1922, %v1921
    %v1949 = vpack.c.b16 %v1924, %v1923
    %v1950 = vpack.c.b16 %v1926, %v1925
    %v1951 = vpack.c.b16 %v1928, %v1927
    %v1952 = vpack.c.b16 %v1930, %v1929
    %v1953 = vpack.c.b16 %v1932, %v1931
    %v1954 = vpack.c.b16 %v1934, %v1933
    %v1955 = vpack.c.b16 %v1936, %v1935
    %v1956 = vpack.c.b16 %v1938, %v1937
    %v1957 = vpack.c.b16 %v1940, %v1939
    %v1958 = vpack.c.b16 %v1942, %v1941
    %1975 = vmatpush.bf16.msra.mxu0 %v1950
    %1976 = vmatpush.bf16.msra.mxu0 %v1949
    %1977 = vmatpush.bf16.msra.mxu0 %v1948
    %1978 = vmatpush.bf16.msra.mxu0 %v1947
    %1979 = vmatpush.bf16.msra.mxu0 %v1946
    %1980 = vmatpush.bf16.msra.mxu0 %v1945
    %1981 = vmatpush.bf16.msra.mxu0 %v1944
    %1982 = vmatpush.bf16.msra.mxu0 %v1943
    %1983 = vmatmul.bf16.gmra.mxu0 %v1839
    %v1984 = vpop.f32.mrf.mxu0
    %v1985 = vadd.f32 %v1877, %v1984
    %v1986 = vpop.f32.mrf.mxu0
    %v1987 = vadd.f32 %v1877, %v1986
    %1988 = vdwg.mxu0
    %1989 = vmatpush.bf16.msra.mxu0 %v1958
    %1990 = vmatpush.bf16.msra.mxu0 %v1957
    %1991 = vmatpush.bf16.msra.mxu0 %v1956
    %1992 = vmatpush.bf16.msra.mxu0 %v1955
    %1993 = vmatpush.bf16.msra.mxu0 %v1954
    %1994 = vmatpush.bf16.msra.mxu0 %v1953
    %1995 = vmatpush.bf16.msra.mxu0 %v1952
    %1996 = vmatpush.bf16.msra.mxu0 %v1951
    %1997 = vmatmul.bf16.gmra.mxu0 %v1840
    %v1998 = vpop.f32.mrf.mxu0
    %v1999 = vadd.f32 %v1985, %v1998
    %v2000 = vpop.f32.mrf.mxu0
    %v2001 = vadd.f32 %v1987, %v2000
    %2002 = vdwg.mxu0
    %v2003 = vtanh.pop %v1999
    %v2004 = vtanh.pop %v2001
    %2005 = vst [vmem:[%s7 + $0x8] sm:$0xff] %v2003
    %2006 = vst [vmem:[%s7 + $0x18] sm:$0xff] %v2004
    // Predicated region
    $region42: #{_forward_impl.1} parent=1 // pred_check
      _
    $region43: #{_forward_impl.1} parent=1 // pred_check_branch
      %2008 = sbr.rel (0) target = $region45
    $region44: #{_forward_impl.1} parent=1 // pred_region
      _
    $region45: #{_forward_impl.1} parent=1 // pred_fallthru
      _
    // Predicated region
    $region46: #{_forward_impl.1} parent=1 // pred_check
      _
    $region47: #{_forward_impl.1} parent=1 // pred_check_branch
      %2010 = sbr.rel (0) target = $region49
    $region48: #{_forward_impl.1} parent=1 // pred_region
      _
    $region49: #{_forward_impl.1} parent=1 // pred_fallthru
      _
    %2011 = vsyncpa [#allocation3], 1
    %2012 = vsyncpa [#allocation5], 1

</llo_original>
